<compile_context>
chip_gen: v5e
topology: v5e:2x2
jax: 0.10.0
libtpu: 0.0.40
codegen_flags: <defaults>
</compile_context>

<pallas_src>
import jax
import jax.numpy as jnp
import numpy as np
from jax import lax
from jax.experimental import pallas as pl
from jax.experimental.pallas import tpu as pltpu

L2_EPS = 1e-12   # F.normalize default eps (applied as max(||x||_2, eps))
IN_EPS = 1e-5    # nn.InstanceNorm2d default eps


def _round_up(x, m):
    return ((x + m - 1) // m) * m


def basic_conv(x, weight, gamma, beta, *, kernel_size=3, padding=1,
               tile=1024, tile2=8192):
    """BasicConv forward.

    x:      (N, Cin, H, W) float32
    weight: (Cout, Cin, K, K)        (no bias, stride 1, 'same' padding = K // 2)
    gamma, beta: (Cout,)             InstanceNorm2d affine parameters
    Returns (N, Cout, H, W).
    """
    N, Cin, H, W = x.shape
    Cout = weight.shape[0]
    K = kernel_size
    pad = padding
    if K % 2 != 1 or pad != K // 2:
        raise NotImplementedError("only odd kernel_size with padding == kernel_size // 2")

    f32 = jnp.float32
    Hp, Wp = H + 2 * pad, W + 2 * pad
    HpWp, HW = Hp * Wp, H * W
    M = pad * Wp + pad                        # flat halo radius around one output position
    Cin_p = _round_up(Cin, 8)                 # 8-aligned sublane stacking of shifted slabs
    KKC = K * K * Cin_p

    # ---- kernel-1 spatial tile T (lane axis, multiple of 128), clamped to a VMEM budget ----
    T = max(128, min(_round_up(tile, 128), _round_up(HpWp, 128)))
    per_lane_bytes = 4 * (KKC + 4 * Cout + 4 * Cin_p + 4)   # slab + acc + y(dbl) + x windows
    while T > 128 and per_lane_bytes * T > (24 << 20):
        T -= 128
    n_tiles = pl.cdiv(HpWp, T)
    Ltot = n_tiles * T

    # Halo margin expressed in whole padded rows so ONE host-side jnp.pad builds the
    # margined, flattened input (no overlapping-window stack, no second pad pass).
    r0 = -(-M // Wp)                          # margin rows in front of the padded image
    Me = r0 * Wp                              # flat front margin (>= M)
    Twin = _round_up(T + 2 * Me, 128)         # lane-dense manual-DMA window length
    need = (n_tiles - 1) * T + Twin           # furthest margined index any window reads
    rows_total = max(r0 + Hp, -(-need // Wp))
    rows_back = rows_total - (r0 + Hp)
    Lm = rows_total * Wp

    xm = jnp.pad(x.astype(f32),
                 ((0, 0), (0, Cin_p - Cin),
                  (r0 + pad, pad + rows_back), (pad, pad))).reshape(N, Cin_p, Lm)

    # Fused conv weights: (Cout, K*K*Cin_p), contraction rows ordered (kh, kw, cin).
    w2 = jnp.pad(weight.astype(f32), ((0, 0), (0, Cin_p - Cin), (0, 0), (0, 0)))
    w2 = jnp.transpose(w2, (0, 2, 3, 1)).reshape(Cout, KKC)

    # Mask of valid (interior, non-padding) flat positions on the padded grid -> stats.
    pidx = jnp.arange(Ltot)
    hh, ww = pidx // Wp, pidx % Wp
    mask = ((pidx < HpWp) & (hh >= pad) & (hh < Hp - pad) &
            (ww >= pad) & (ww < Wp - pad)).astype(f32).reshape(1, Ltot)

    gamma2 = gamma.astype(f32).reshape(Cout, 1)
    beta2 = beta.astype(f32).reshape(Cout, 1)

    # ------------- kernel 1: conv (single fused MXU contraction) + L2 + stats -------------
    def conv_l2_kernel(x_hbm, w_ref, mask_ref, y_ref, sum_ref, ssq_ref,
                       xbuf, slab_ref, sem):
        n = pl.program_id(0)
        t = pl.program_id(1)
        slot = lax.rem(t, 2)

        def window_copy(tile_idx, buf_slot):
            off = pl.multiple_of(tile_idx * T, 128)
            return pltpu.make_async_copy(
                x_hbm.at[n, :, pl.ds(off, Twin)], xbuf.at[buf_slot], sem.at[buf_slot])

        @pl.when(t == 0)
        def _init():
            sum_ref[...] = jnp.zeros_like(sum_ref)
            ssq_ref[...] = jnp.zeros_like(ssq_ref)
            window_copy(t, slot).start()        # prime the DMA pipeline for this image

        window_copy(t, slot).wait()             # current haloed window now in VMEM

        @pl.when(t + 1 < pl.num_programs(1))
        def _prefetch():
            window_copy(t + 1, 1 - slot).start()

        # im2col-in-VMEM: K*K shifted (Cin_p, T) slabs stacked -> one (KKC, T) contraction.
        for kh in range(K):
            for kw in range(K):
                s = kh * K + kw
                s0 = Me + (kh - pad) * Wp + (kw - pad)          # static, >= 0, < Twin - T
                slab_ref[s * Cin_p:(s + 1) * Cin_p, :] = xbuf[slot, :, s0:s0 + T]
        acc = jnp.dot(w_ref[...], slab_ref[...], preferred_element_type=f32)   # (Cout, T)

        # F.normalize(x, p=2, dim=1): x / max(||x||_2, eps) == x * rsqrt(max(sumsq, eps^2))
        ssq_c = jnp.sum(acc * acc, axis=0, keepdims=True)                      # (1, T)
        yn = acc * lax.rsqrt(jnp.maximum(ssq_c, L2_EPS * L2_EPS))              # (Cout, T)
        y_ref[0] = yn.astype(y_ref.dtype)

        m = mask_ref[...]                                                      # (1, T)
        ym = yn * m
        sum_ref[0] += jnp.sum(ym, axis=1, keepdims=True)                       # (Cout, 1)
        ssq_ref[0] += jnp.sum(yn * ym, axis=1, keepdims=True)                  # (Cout, 1)

    y, sums, ssqs = pl.pallas_call(
        conv_l2_kernel,
        out_shape=(
            jax.ShapeDtypeStruct((N, Cout, Ltot), f32),
            jax.ShapeDtypeStruct((N, Cout, 1), f32),
            jax.ShapeDtypeStruct((N, Cout, 1), f32),
        ),
        grid_spec=pltpu.PrefetchScalarGridSpec(
            num_scalar_prefetch=0,
            grid=(N, n_tiles),
            in_specs=[
                pl.BlockSpec(memory_space=pl.ANY),                       # xm stays in HBM
                pl.BlockSpec((Cout, KKC), lambda n, t: (0, 0)),
                pl.BlockSpec((1, T), lambda n, t: (0, t)),
            ],
            out_specs=(
                pl.BlockSpec((1, Cout, T), lambda n, t: (n, 0, t)),
                pl.BlockSpec((1, Cout, 1), lambda n, t: (n, 0, 0)),
                pl.BlockSpec((1, Cout, 1), lambda n, t: (n, 0, 0)),
            ),
            scratch_shapes=[
                pltpu.VMEM((2, Cin_p, Twin), f32),      # double-buffered haloed x window
                pltpu.VMEM((KKC, T), f32),              # im2col slab
                pltpu.SemaphoreType.DMA((2,)),
            ]),
        compiler_params=pltpu.CompilerParams(
            dimension_semantics=("parallel", "arbitrary"),
            vmem_limit_bytes=48 * 1024 * 1024),
    )(xm, w2, mask)

    # ---------- kernel 2: InstanceNorm (affine, single FMA) + ReLU, big lane tiles ----------
    t2_cap = min(_round_up(tile2, 128), Ltot)
    t2_cap = min(t2_cap, max(128, ((24 << 20) // (Cout * 4 * 5)) // 128 * 128))
    g = 1
    for d in range(1, n_tiles + 1):
        if n_tiles % d == 0 and T * d <= t2_cap:
            g = d
    T2 = T * g
    n_tiles2 = n_tiles // g

    inv_count = 1.0 / float(HW)

    def in_relu_kernel(y_ref, sum_ref, ssq_ref, g_ref, b_ref, o_ref):
        mean = sum_ref[0] * inv_count                                   # (Cout, 1)
        var = ssq_ref[0] * inv_count - mean * mean                      # biased variance
        scale = g_ref[...] * lax.rsqrt(var + IN_EPS)                    # (Cout, 1)
        bias = b_ref[...] - mean * scale
        o_ref[0] = jnp.maximum(y_ref[0] * scale + bias, 0.0).astype(o_ref.dtype)

    out = pl.pallas_call(
        in_relu_kernel,
        out_shape=jax.ShapeDtypeStruct((N, Cout, Ltot), f32),
        grid_spec=pltpu.PrefetchScalarGridSpec(
            num_scalar_prefetch=0,
            grid=(N, n_tiles2),
            in_specs=[
                pl.BlockSpec((1, Cout, T2), lambda n, t: (n, 0, t)),
                pl.BlockSpec((1, Cout, 1), lambda n, t: (n, 0, 0)),
                pl.BlockSpec((1, Cout, 1), lambda n, t: (n, 0, 0)),
                pl.BlockSpec((Cout, 1), lambda n, t: (0, 0)),
                pl.BlockSpec((Cout, 1), lambda n, t: (0, 0)),
            ],
            out_specs=pl.BlockSpec((1, Cout, T2), lambda n, t: (n, 0, t))),
        compiler_params=pltpu.CompilerParams(
            dimension_semantics=("parallel", "parallel"),
            vmem_limit_bytes=48 * 1024 * 1024),
    )(y, sums, ssqs, gamma2, beta2)

    # Drop round-up tail + padding ring; output is already NC(HW)-ordered (slice, no transpose).
    out = out[:, :, :HpWp].reshape(N, Cout, Hp, Wp)
    return out[:, :, pad:pad + H, pad:pad + W]


def _reference(x, weight, gamma, beta):
    # Pure-JAX reference mirroring the PyTorch forward.
    y = jax.lax.conv_general_dilated(
        x.astype(jnp.float32), weight.astype(jnp.float32),
        window_strides=(1, 1), padding=((1, 1), (1, 1)),
        dimension_numbers=("NCHW", "OIHW", "NCHW"))
    nrm = jnp.sqrt(jnp.sum(y * y, axis=1, keepdims=True))
    y = y / jnp.maximum(nrm, L2_EPS)
    mean = jnp.mean(y, axis=(2, 3), keepdims=True)
    var = jnp.mean((y - mean) ** 2, axis=(2, 3), keepdims=True)
    y = (y - mean) * jax.lax.rsqrt(var + IN_EPS)
    y = y * gamma[None, :, None, None] + beta[None, :, None, None]
    return jnp.maximum(y, 0.0)


if __name__ == "__main__":
    key = jax.random.PRNGKey(0)
    kx, kw, kg, kb = jax.random.split(key, 4)

    N, Cin, Cout, H, W, K = 2, 4, 8, 16, 16, 3

    x = jax.random.normal(kx, (N, Cin, H, W), dtype=jnp.float32)
    weight = 0.1 * jax.random.normal(kw, (Cout, Cin, K, K), dtype=jnp.float32)
    gamma = 1.0 + 0.1 * jax.random.normal(kg, (Cout,), dtype=jnp.float32)
    beta = 0.1 * jax.random.normal(kb, (Cout,), dtype=jnp.float32)

    out = jax.block_until_ready(jax.jit(basic_conv)(x, weight, gamma, beta))
    ref = jax.block_until_ready(_reference(x, weight, gamma, beta))

    np.testing.assert_allclose(np.asarray(out), np.asarray(ref), atol=1e-4, rtol=1e-4)
    print("KERNEL_OK")
</pallas_src>

<mosaic_0001>
module attributes {stable_mosaic.version = 11 : i64} {
  func.func @in_relu_kernel(%arg0: i32, %arg1: i32, %arg2: memref<1x8x384xf32, #tpu.memory_space<vmem>>, %arg3: memref<1x8x1xf32, #tpu.memory_space<vmem>>, %arg4: memref<1x8x1xf32, #tpu.memory_space<vmem>>, %arg5: memref<8x1xf32, #tpu.memory_space<vmem>>, %arg6: memref<8x1xf32, #tpu.memory_space<vmem>>, %arg7: memref<1x8x384xf32, #tpu.memory_space<vmem>>) attributes {dimension_semantics = [#tpu.dimension_semantics<parallel>, #tpu.dimension_semantics<parallel>], iteration_bounds = array<i64: 2, 1>, scalar_prefetch = 0 : i64, scratch_operands = 0 : i64, tpu.core_type = #tpu.core_type<tc>, window_params = [{transform_indices = @transform_0, window_bounds = array<i64: 1, 8, 384>}, {transform_indices = @transform_1, window_bounds = array<i64: 1, 8, 1>}, {transform_indices = @transform_2, window_bounds = array<i64: 1, 8, 1>}, {pipeline_mode = #tpu.pipeline_mode<synchronous>, transform_indices = @transform_3, window_bounds = array<i64: 8, 1>}, {pipeline_mode = #tpu.pipeline_mode<synchronous>, transform_indices = @transform_4, window_bounds = array<i64: 8, 1>}, {transform_indices = @transform_5, window_bounds = array<i64: 1, 8, 384>}]} {
    %c0 = arith.constant 0 : index
    %c0_0 = arith.constant 0 : index
    %c0_1 = arith.constant 0 : index
    %0 = vector.load %arg3[%c0, %c0_0, %c0_1] : memref<1x8x1xf32, #tpu.memory_space<vmem>>, vector<1x8x1xf32>
    %1 = vector.shape_cast %0 : vector<1x8x1xf32> to vector<8x1xf32>
    %cst = arith.constant 3.906250e-03 : f32
    %2 = vector.broadcast %cst : f32 to vector<8x1xf32>
    %3 = arith.mulf %1, %2 : vector<8x1xf32>
    %c0_2 = arith.constant 0 : index
    %c0_3 = arith.constant 0 : index
    %c0_4 = arith.constant 0 : index
    %4 = vector.load %arg4[%c0_2, %c0_3, %c0_4] : memref<1x8x1xf32, #tpu.memory_space<vmem>>, vector<1x8x1xf32>
    %5 = vector.shape_cast %4 : vector<1x8x1xf32> to vector<8x1xf32>
    %cst_5 = arith.constant 3.906250e-03 : f32
    %6 = vector.broadcast %cst_5 : f32 to vector<8x1xf32>
    %7 = arith.mulf %5, %6 : vector<8x1xf32>
    %8 = arith.mulf %3, %3 : vector<8x1xf32>
    %9 = arith.subf %7, %8 : vector<8x1xf32>
    %c0_6 = arith.constant 0 : index
    %c0_7 = arith.constant 0 : index
    %10 = vector.load %arg5[%c0_6, %c0_7] : memref<8x1xf32, #tpu.memory_space<vmem>>, vector<8x1xf32>
    %cst_8 = arith.constant 9.99999974E-6 : f32
    %11 = vector.broadcast %cst_8 : f32 to vector<8x1xf32>
    %12 = arith.addf %9, %11 : vector<8x1xf32>
    %13 = math.rsqrt %12 : vector<8x1xf32>
    %14 = arith.mulf %10, %13 : vector<8x1xf32>
    %c0_9 = arith.constant 0 : index
    %c0_10 = arith.constant 0 : index
    %15 = vector.load %arg6[%c0_9, %c0_10] : memref<8x1xf32, #tpu.memory_space<vmem>>, vector<8x1xf32>
    %16 = arith.mulf %3, %14 : vector<8x1xf32>
    %17 = arith.subf %15, %16 : vector<8x1xf32>
    %c0_11 = arith.constant 0 : index
    %c0_12 = arith.constant 0 : index
    %c0_13 = arith.constant 0 : index
    %18 = vector.load %arg2[%c0_11, %c0_12, %c0_13] : memref<1x8x384xf32, #tpu.memory_space<vmem>>, vector<1x8x384xf32>
    %19 = vector.shape_cast %18 : vector<1x8x384xf32> to vector<8x384xf32>
    %20 = vector.broadcast %14 : vector<8x1xf32> to vector<8x384xf32>
    %21 = arith.mulf %19, %20 : vector<8x384xf32>
    %22 = vector.broadcast %17 : vector<8x1xf32> to vector<8x384xf32>
    %23 = arith.addf %21, %22 : vector<8x384xf32>
    %cst_14 = arith.constant 0.000000e+00 : f32
    %24 = vector.broadcast %cst_14 : f32 to vector<8x384xf32>
    %25 = arith.maximumf %23, %24 : vector<8x384xf32>
    %c0_15 = arith.constant 0 : index
    %c0_16 = arith.constant 0 : index
    %c0_17 = arith.constant 0 : index
    %26 = vector.load %arg7[%c0_15, %c0_16, %c0_17] : memref<1x8x384xf32, #tpu.memory_space<vmem>>, vector<1x8x384xf32>
    %27 = vector.shape_cast %26 : vector<1x8x384xf32> to vector<8x384xf32>
    %28 = vector.shape_cast %25 : vector<8x384xf32> to vector<1x8x384xf32>
    tpu.vector_store %arg7[%c0_15, %c0_16, %c0_17], %28 {strides = array<i32>} : memref<1x8x384xf32, #tpu.memory_space<vmem>>, vector<1x8x384xf32>,
    return
  }
  func.func @transform_0(%arg0: i32, %arg1: i32) -> (i32, i32, i32) {
    %c0_i32 = arith.constant 0 : i32
    %c0_i32_0 = arith.constant 0 : i32
    return %arg0, %c0_i32, %arg1 : i32, i32, i32
  }
  func.func @transform_1(%arg0: i32, %arg1: i32) -> (i32, i32, i32) {
    %c0_i32 = arith.constant 0 : i32
    %c0_i32_0 = arith.constant 0 : i32
    %c0_i32_1 = arith.constant 0 : i32
    return %arg0, %c0_i32, %c0_i32_0 : i32, i32, i32
  }
  func.func @transform_2(%arg0: i32, %arg1: i32) -> (i32, i32, i32) {
    %c0_i32 = arith.constant 0 : i32
    %c0_i32_0 = arith.constant 0 : i32
    %c0_i32_1 = arith.constant 0 : i32
    return %arg0, %c0_i32, %c0_i32_0 : i32, i32, i32
  }
  func.func @transform_3(%arg0: i32, %arg1: i32) -> (i32, i32) {
    %c0_i32 = arith.constant 0 : i32
    %c0_i32_0 = arith.constant 0 : i32
    %c0_i32_1 = arith.constant 0 : i32
    return %c0_i32, %c0_i32_0 : i32, i32
  }
  func.func @transform_4(%arg0: i32, %arg1: i32) -> (i32, i32) {
    %c0_i32 = arith.constant 0 : i32
    %c0_i32_0 = arith.constant 0 : i32
    %c0_i32_1 = arith.constant 0 : i32
    return %c0_i32, %c0_i32_0 : i32, i32
  }
  func.func @transform_5(%arg0: i32, %arg1: i32) -> (i32, i32, i32) {
    %c0_i32 = arith.constant 0 : i32
    %c0_i32_0 = arith.constant 0 : i32
    return %arg0, %c0_i32, %arg1 : i32, i32, i32
  }
}

module attributes {stable_mosaic.version = 11 : i64} {
  func.func @conv_l2_kernel(%arg0: i32, %arg1: i32, %arg2: memref<2x8x522xf32, #tpu.memory_space<any>>, %arg3: memref<8x72xf32, #tpu.memory_space<vmem>>, %arg4: memref<1x384xf32, #tpu.memory_space<vmem>>, %arg5: memref<1x8x384xf32, #tpu.memory_space<vmem>>, %arg6: memref<1x8x1xf32, #tpu.memory_space<vmem>>, %arg7: memref<1x8x1xf32, #tpu.memory_space<vmem>>, %arg8: memref<2x8x512xf32, #tpu.memory_space<vmem>>, %arg9: memref<72x384xf32, #tpu.memory_space<vmem>>, %arg10: memref<2x!tpu.dma_semaphore, #tpu.memory_space<semaphore_mem>>) attributes {dimension_semantics = [#tpu.dimension_semantics<parallel>, #tpu.dimension_semantics<arbitrary>], iteration_bounds = array<i64: 2, 1>, scalar_prefetch = 0 : i64, scratch_operands = 3 : i64, tpu.core_type = #tpu.core_type<tc>, window_params = [{}, {pipeline_mode = #tpu.pipeline_mode<synchronous>, transform_indices = @transform_1, window_bounds = array<i64: 8, 72>}, {transform_indices = @transform_2, window_bounds = array<i64: 1, 384>}, {transform_indices = @transform_3, window_bounds = array<i64: 1, 8, 384>}, {transform_indices = @transform_4, window_bounds = array<i64: 1, 8, 1>}, {transform_indices = @transform_5, window_bounds = array<i64: 1, 8, 1>}]} {
    %c2_i32 = arith.constant 2 : i32
    %0 = arith.remsi %arg1, %c2_i32 : i32
    %c0_i32 = arith.constant 0 : i32
    %1 = arith.cmpi eq, %arg1, %c0_i32 : i32
    %2 = arith.extui %1 : i1 to i32
    %c0_i32_0 = arith.constant 0 : i32
    %3 = arith.cmpi ne, %2, %c0_i32_0 : i32
    scf.if %3 {
      %cst_49 = arith.constant 0.000000e+00 : f32
      %86 = vector.broadcast %cst_49 : f32 to vector<1x8x1xf32>
      %c0_50 = arith.constant 0 : index
      %c0_51 = arith.constant 0 : index
      %c0_52 = arith.constant 0 : index
      %87 = vector.load %arg6[%c0_50, %c0_51, %c0_52] : memref<1x8x1xf32, #tpu.memory_space<vmem>>, vector<1x8x1xf32>
      tpu.vector_store %arg6[%c0_50, %c0_51, %c0_52], %86 {strides = array<i32>} : memref<1x8x1xf32, #tpu.memory_space<vmem>>, vector<1x8x1xf32>,
      %cst_53 = arith.constant 0.000000e+00 : f32
      %88 = vector.broadcast %cst_53 : f32 to vector<1x8x1xf32>
      %c0_54 = arith.constant 0 : index
      %c0_55 = arith.constant 0 : index
      %c0_56 = arith.constant 0 : index
      %89 = vector.load %arg7[%c0_54, %c0_55, %c0_56] : memref<1x8x1xf32, #tpu.memory_space<vmem>>, vector<1x8x1xf32>
      tpu.vector_store %arg7[%c0_54, %c0_55, %c0_56], %88 {strides = array<i32>} : memref<1x8x1xf32, #tpu.memory_space<vmem>>, vector<1x8x1xf32>,
      %c384_i32_57 = arith.constant 384 : i32
      %90 = arith.muli %arg1, %c384_i32_57 : i32
      %91 = tpu.assume_multiple %90, 128 : i32
      %c0_i32_58 = arith.constant 0 : i32
      %92 = tpu.memref_slice %arg2[%arg0, %c0_i32_58, %91] : memref<2x8x522xf32, #tpu.memory_space<any>> -> memref<1x8x512xf32, #tpu.memory_space<any>>
      %93 = tpu.memref_squeeze %92 : memref<1x8x512xf32, #tpu.memory_space<any>> -> memref<8x512xf32, #tpu.memory_space<any>>
      %c0_i32_59 = arith.constant 0 : i32
      %c0_i32_60 = arith.constant 0 : i32
      %94 = tpu.memref_slice %arg8[%0, %c0_i32_59, %c0_i32_60] : memref<2x8x512xf32, #tpu.memory_space<vmem>> -> memref<1x8x512xf32, #tpu.memory_space<vmem>>
      %95 = tpu.memref_squeeze %94 : memref<1x8x512xf32, #tpu.memory_space<vmem>> -> memref<8x512xf32, #tpu.memory_space<vmem>>
      %96 = tpu.memref_slice %arg10[%0] : memref<2x!tpu.dma_semaphore, #tpu.memory_space<semaphore_mem>> -> memref<1x!tpu.dma_semaphore, #tpu.memory_space<semaphore_mem>>
      %97 = tpu.memref_squeeze %96 : memref<1x!tpu.dma_semaphore, #tpu.memory_space<semaphore_mem>> -> memref<!tpu.dma_semaphore, #tpu.memory_space<semaphore_mem>>
      tpu.enqueue_dma source(%93 : memref<8x512xf32, #tpu.memory_space<any>>) target(%95 : memref<8x512xf32, #tpu.memory_space<vmem>>) target_semaphore(%97 : memref<!tpu.dma_semaphore, #tpu.memory_space<semaphore_mem>>)
    } else {
    }
    %c384_i32 = arith.constant 384 : i32
    %4 = arith.muli %arg1, %c384_i32 : i32
    %5 = tpu.assume_multiple %4, 128 : i32
    %c0_i32_1 = arith.constant 0 : i32
    %6 = tpu.memref_slice %arg2[%arg0, %c0_i32_1, %5] : memref<2x8x522xf32, #tpu.memory_space<any>> -> memref<1x8x512xf32, #tpu.memory_space<any>>
    %7 = tpu.memref_squeeze %6 : memref<1x8x512xf32, #tpu.memory_space<any>> -> memref<8x512xf32, #tpu.memory_space<any>>
    %c0_i32_2 = arith.constant 0 : i32
    %c0_i32_3 = arith.constant 0 : i32
    %8 = tpu.memref_slice %arg8[%0, %c0_i32_2, %c0_i32_3] : memref<2x8x512xf32, #tpu.memory_space<vmem>> -> memref<1x8x512xf32, #tpu.memory_space<vmem>>
    %9 = tpu.memref_squeeze %8 : memref<1x8x512xf32, #tpu.memory_space<vmem>> -> memref<8x512xf32, #tpu.memory_space<vmem>>
    %10 = tpu.memref_slice %arg10[%0] : memref<2x!tpu.dma_semaphore, #tpu.memory_space<semaphore_mem>> -> memref<1x!tpu.dma_semaphore, #tpu.memory_space<semaphore_mem>>
    %11 = tpu.memref_squeeze %10 : memref<1x!tpu.dma_semaphore, #tpu.memory_space<semaphore_mem>> -> memref<!tpu.dma_semaphore, #tpu.memory_space<semaphore_mem>>
    tpu.wait_dma2 semaphore(%11 : memref<!tpu.dma_semaphore, #tpu.memory_space<semaphore_mem>>) src(%7 : memref<8x512xf32, #tpu.memory_space<any>>) dst(%9 : memref<8x512xf32, #tpu.memory_space<vmem>>)
    %c1_i32 = arith.constant 1 : i32
    %12 = arith.addi %arg1, %c1_i32 : i32
    %c1_i32_4 = arith.constant 1 : i32
    %13 = arith.cmpi slt, %12, %c1_i32_4 : i32
    %14 = arith.extui %13 : i1 to i32
    %c0_i32_5 = arith.constant 0 : i32
    %15 = arith.cmpi ne, %14, %c0_i32_5 : i32
    scf.if %15 {
      %c1_i32_49 = arith.constant 1 : i32
      %86 = arith.addi %arg1, %c1_i32_49 : i32
      %c1_i32_50 = arith.constant 1 : i32
      %87 = arith.subi %c1_i32_50, %0 : i32
      %c384_i32_51 = arith.constant 384 : i32
      %88 = arith.muli %86, %c384_i32_51 : i32
      %89 = tpu.assume_multiple %88, 128 : i32
      %c0_i32_52 = arith.constant 0 : i32
      %90 = tpu.memref_slice %arg2[%arg0, %c0_i32_52, %89] : memref<2x8x522xf32, #tpu.memory_space<any>> -> memref<1x8x512xf32, #tpu.memory_space<any>>
      %91 = tpu.memref_squeeze %90 : memref<1x8x512xf32, #tpu.memory_space<any>> -> memref<8x512xf32, #tpu.memory_space<any>>
      %c0_i32_53 = arith.constant 0 : i32
      %c0_i32_54 = arith.constant 0 : i32
      %92 = tpu.memref_slice %arg8[%87, %c0_i32_53, %c0_i32_54] : memref<2x8x512xf32, #tpu.memory_space<vmem>> -> memref<1x8x512xf32, #tpu.memory_space<vmem>>
      %93 = tpu.memref_squeeze %92 : memref<1x8x512xf32, #tpu.memory_space<vmem>> -> memref<8x512xf32, #tpu.memory_space<vmem>>
      %94 = tpu.memref_slice %arg10[%87] : memref<2x!tpu.dma_semaphore, #tpu.memory_space<semaphore_mem>> -> memref<1x!tpu.dma_semaphore, #tpu.memory_space<semaphore_mem>>
      %95 = tpu.memref_squeeze %94 : memref<1x!tpu.dma_semaphore, #tpu.memory_space<semaphore_mem>> -> memref<!tpu.dma_semaphore, #tpu.memory_space<semaphore_mem>>
      tpu.enqueue_dma source(%91 : memref<8x512xf32, #tpu.memory_space<any>>) target(%93 : memref<8x512xf32, #tpu.memory_space<vmem>>) target_semaphore(%95 : memref<!tpu.dma_semaphore, #tpu.memory_space<semaphore_mem>>)
    } else {
    }
    %16 = arith.index_cast %0 : i32 to index
    %c0 = arith.constant 0 : index
    %c17 = arith.constant 17 : index
    %17 = vector.load %arg8[%16, %c0, %c17] : memref<2x8x512xf32, #tpu.memory_space<vmem>>, vector<1x8x384xf32>
    %18 = vector.shape_cast %17 : vector<1x8x384xf32> to vector<8x384xf32>
    %c0_6 = arith.constant 0 : index
    %c0_7 = arith.constant 0 : index
    %19 = vector.load %arg9[%c0_6, %c0_7] : memref<72x384xf32, #tpu.memory_space<vmem>>, vector<8x384xf32>
    tpu.vector_store %arg9[%c0_6, %c0_7], %18 {strides = array<i32>} : memref<72x384xf32, #tpu.memory_space<vmem>>, vector<8x384xf32>,
    %20 = arith.index_cast %0 : i32 to index
    %c0_8 = arith.constant 0 : index
    %c18 = arith.constant 18 : index
    %21 = vector.load %arg8[%20, %c0_8, %c18] : memref<2x8x512xf32, #tpu.memory_space<vmem>>, vector<1x8x384xf32>
    %22 = vector.shape_cast %21 : vector<1x8x384xf32> to vector<8x384xf32>
    %c8 = arith.constant 8 : index
    %c0_9 = arith.constant 0 : index
    %23 = vector.load %arg9[%c8, %c0_9] : memref<72x384xf32, #tpu.memory_space<vmem>>, vector<8x384xf32>
    tpu.vector_store %arg9[%c8, %c0_9], %22 {strides = array<i32>} : memref<72x384xf32, #tpu.memory_space<vmem>>, vector<8x384xf32>,
    %24 = arith.index_cast %0 : i32 to index
    %c0_10 = arith.constant 0 : index
    %c19 = arith.constant 19 : index
    %25 = vector.load %arg8[%24, %c0_10, %c19] : memref<2x8x512xf32, #tpu.memory_space<vmem>>, vector<1x8x384xf32>
    %26 = vector.shape_cast %25 : vector<1x8x384xf32> to vector<8x384xf32>
    %c16 = arith.constant 16 : index
    %c0_11 = arith.constant 0 : index
    %27 = vector.load %arg9[%c16, %c0_11] : memref<72x384xf32, #tpu.memory_space<vmem>>, vector<8x384xf32>
    tpu.vector_store %arg9[%c16, %c0_11], %26 {strides = array<i32>} : memref<72x384xf32, #tpu.memory_space<vmem>>, vector<8x384xf32>,
    %28 = arith.index_cast %0 : i32 to index
    %c0_12 = arith.constant 0 : index
    %c35 = arith.constant 35 : index
    %29 = vector.load %arg8[%28, %c0_12, %c35] : memref<2x8x512xf32, #tpu.memory_space<vmem>>, vector<1x8x384xf32>
    %30 = vector.shape_cast %29 : vector<1x8x384xf32> to vector<8x384xf32>
    %c24 = arith.constant 24 : index
    %c0_13 = arith.constant 0 : index
    %31 = vector.load %arg9[%c24, %c0_13] : memref<72x384xf32, #tpu.memory_space<vmem>>, vector<8x384xf32>
    tpu.vector_store %arg9[%c24, %c0_13], %30 {strides = array<i32>} : memref<72x384xf32, #tpu.memory_space<vmem>>, vector<8x384xf32>,
    %32 = arith.index_cast %0 : i32 to index
    %c0_14 = arith.constant 0 : index
    %c36 = arith.constant 36 : index
    %33 = vector.load %arg8[%32, %c0_14, %c36] : memref<2x8x512xf32, #tpu.memory_space<vmem>>, vector<1x8x384xf32>
    %34 = vector.shape_cast %33 : vector<1x8x384xf32> to vector<8x384xf32>
    %c32 = arith.constant 32 : index
    %c0_15 = arith.constant 0 : index
    %35 = vector.load %arg9[%c32, %c0_15] : memref<72x384xf32, #tpu.memory_space<vmem>>, vector<8x384xf32>
    tpu.vector_store %arg9[%c32, %c0_15], %34 {strides = array<i32>} : memref<72x384xf32, #tpu.memory_space<vmem>>, vector<8x384xf32>,
    %36 = arith.index_cast %0 : i32 to index
    %c0_16 = arith.constant 0 : index
    %c37 = arith.constant 37 : index
    %37 = vector.load %arg8[%36, %c0_16, %c37] : memref<2x8x512xf32, #tpu.memory_space<vmem>>, vector<1x8x384xf32>
    %38 = vector.shape_cast %37 : vector<1x8x384xf32> to vector<8x384xf32>
    %c40 = arith.constant 40 : index
    %c0_17 = arith.constant 0 : index
    %39 = vector.load %arg9[%c40, %c0_17] : memref<72x384xf32, #tpu.memory_space<vmem>>, vector<8x384xf32>
    tpu.vector_store %arg9[%c40, %c0_17], %38 {strides = array<i32>} : memref<72x384xf32, #tpu.memory_space<vmem>>, vector<8x384xf32>,
    %40 = arith.index_cast %0 : i32 to index
    %c0_18 = arith.constant 0 : index
    %c53 = arith.constant 53 : index
    %41 = vector.load %arg8[%40, %c0_18, %c53] : memref<2x8x512xf32, #tpu.memory_space<vmem>>, vector<1x8x384xf32>
    %42 = vector.shape_cast %41 : vector<1x8x384xf32> to vector<8x384xf32>
    %c48 = arith.constant 48 : index
    %c0_19 = arith.constant 0 : index
    %43 = vector.load %arg9[%c48, %c0_19] : memref<72x384xf32, #tpu.memory_space<vmem>>, vector<8x384xf32>
    tpu.vector_store %arg9[%c48, %c0_19], %42 {strides = array<i32>} : memref<72x384xf32, #tpu.memory_space<vmem>>, vector<8x384xf32>,
    %44 = arith.index_cast %0 : i32 to index
    %c0_20 = arith.constant 0 : index
    %c54 = arith.constant 54 : index
    %45 = vector.load %arg8[%44, %c0_20, %c54] : memref<2x8x512xf32, #tpu.memory_space<vmem>>, vector<1x8x384xf32>
    %46 = vector.shape_cast %45 : vector<1x8x384xf32> to vector<8x384xf32>
    %c56 = arith.constant 56 : index
    %c0_21 = arith.constant 0 : index
    %47 = vector.load %arg9[%c56, %c0_21] : memref<72x384xf32, #tpu.memory_space<vmem>>, vector<8x384xf32>
    tpu.vector_store %arg9[%c56, %c0_21], %46 {strides = array<i32>} : memref<72x384xf32, #tpu.memory_space<vmem>>, vector<8x384xf32>,
    %48 = arith.index_cast %0 : i32 to index
    %c0_22 = arith.constant 0 : index
    %c55 = arith.constant 55 : index
    %49 = vector.load %arg8[%48, %c0_22, %c55] : memref<2x8x512xf32, #tpu.memory_space<vmem>>, vector<1x8x384xf32>
    %50 = vector.shape_cast %49 : vector<1x8x384xf32> to vector<8x384xf32>
    %c64 = arith.constant 64 : index
    %c0_23 = arith.constant 0 : index
    %51 = vector.load %arg9[%c64, %c0_23] : memref<72x384xf32, #tpu.memory_space<vmem>>, vector<8x384xf32>
    tpu.vector_store %arg9[%c64, %c0_23], %50 {strides = array<i32>} : memref<72x384xf32, #tpu.memory_space<vmem>>, vector<8x384xf32>,
    %c0_24 = arith.constant 0 : index
    %c0_25 = arith.constant 0 : index
    %52 = vector.load %arg3[%c0_24, %c0_25] : memref<8x72xf32, #tpu.memory_space<vmem>>, vector<8x72xf32>
    %c0_26 = arith.constant 0 : index
    %c0_27 = arith.constant 0 : index
    %53 = vector.load %arg9[%c0_26, %c0_27] : memref<72x384xf32, #tpu.memory_space<vmem>>, vector<72x384xf32>
    %cst = arith.constant dense<0.000000e+00> : vector<8x384xf32>
    %54 = tpu.matmul %52, %53, %cst {dimension_numbers = #tpu.dot_dimension_numbers<[1], [0], [0], [1], [0, 0, 1, 1], [], []>} : vector<8x72xf32>, vector<72x384xf32>, vector<8x384xf32> -> vector<8x384xf32>
    %55 = arith.mulf %54, %54 : vector<8x384xf32>
    %cst_28 = arith.constant dense<0.000000e+00> : vector<384xf32>
    %56 = vector.multi_reduction <add>, %55, %cst_28 [0] : vector<8x384xf32> to vector<384xf32>
    %57 = vector.shape_cast %56 : vector<384xf32> to vector<1x384xf32>
    %cst_29 = arith.constant 1.000000e-24 : f32
    %58 = vector.broadcast %cst_29 : f32 to vector<1x384xf32>
    %59 = arith.maximumf %57, %58 : vector<1x384xf32>
    %60 = math.rsqrt %59 : vector<1x384xf32>
    %61 = vector.broadcast %60 : vector<1x384xf32> to vector<8x384xf32>
    %62 = arith.mulf %54, %61 : vector<8x384xf32>
    %c0_30 = arith.constant 0 : index
    %c0_31 = arith.constant 0 : index
    %c0_32 = arith.constant 0 : index
    %63 = vector.load %arg5[%c0_30, %c0_31, %c0_32] : memref<1x8x384xf32, #tpu.memory_space<vmem>>, vector<1x8x384xf32>
    %64 = vector.shape_cast %63 : vector<1x8x384xf32> to vector<8x384xf32>
    %65 = vector.shape_cast %62 : vector<8x384xf32> to vector<1x8x384xf32>
    tpu.vector_store %arg5[%c0_30, %c0_31, %c0_32], %65 {strides = array<i32>} : memref<1x8x384xf32, #tpu.memory_space<vmem>>, vector<1x8x384xf32>,
    %c0_33 = arith.constant 0 : index
    %c0_34 = arith.constant 0 : index
    %66 = vector.load %arg4[%c0_33, %c0_34] : memref<1x384xf32, #tpu.memory_space<vmem>>, vector<1x384xf32>
    %67 = vector.broadcast %66 : vector<1x384xf32> to vector<8x384xf32>
    %68 = arith.mulf %62, %67 : vector<8x384xf32>
    %c0_35 = arith.constant 0 : index
    %c0_36 = arith.constant 0 : index
    %c0_37 = arith.constant 0 : index
    %69 = vector.load %arg6[%c0_35, %c0_36, %c0_37] : memref<1x8x1xf32, #tpu.memory_space<vmem>>, vector<1x8x1xf32>
    %70 = vector.shape_cast %69 : vector<1x8x1xf32> to vector<8x1xf32>
    %cst_38 = arith.constant dense<0.000000e+00> : vector<8xf32>
    %71 = vector.multi_reduction <add>, %68, %cst_38 [1] : vector<8x384xf32> to vector<8xf32>
    %72 = vector.shape_cast %71 : vector<8xf32> to vector<8x1xf32>
    %73 = arith.addf %70, %72 : vector<8x1xf32>
    %c0_39 = arith.constant 0 : index
    %c0_40 = arith.constant 0 : index
    %c0_41 = arith.constant 0 : index
    %74 = vector.load %arg6[%c0_39, %c0_40, %c0_41] : memref<1x8x1xf32, #tpu.memory_space<vmem>>, vector<1x8x1xf32>
    %75 = vector.shape_cast %74 : vector<1x8x1xf32> to vector<8x1xf32>
    %76 = vector.shape_cast %73 : vector<8x1xf32> to vector<1x8x1xf32>
    tpu.vector_store %arg6[%c0_39, %c0_40, %c0_41], %76 {strides = array<i32>} : memref<1x8x1xf32, #tpu.memory_space<vmem>>, vector<1x8x1xf32>,
    %c0_42 = arith.constant 0 : index
    %c0_43 = arith.constant 0 : index
    %c0_44 = arith.constant 0 : index
    %77 = vector.load %arg7[%c0_42, %c0_43, %c0_44] : memref<1x8x1xf32, #tpu.memory_space<vmem>>, vector<1x8x1xf32>
    %78 = vector.shape_cast %77 : vector<1x8x1xf32> to vector<8x1xf32>
    %79 = arith.mulf %62, %68 : vector<8x384xf32>
    %cst_45 = arith.constant dense<0.000000e+00> : vector<8xf32>
    %80 = vector.multi_reduction <add>, %79, %cst_45 [1] : vector<8x384xf32> to vector<8xf32>
    %81 = vector.shape_cast %80 : vector<8xf32> to vector<8x1xf32>
    %82 = arith.addf %78, %81 : vector<8x1xf32>
    %c0_46 = arith.constant 0 : index
    %c0_47 = arith.constant 0 : index
    %c0_48 = arith.constant 0 : index
    %83 = vector.load %arg7[%c0_46, %c0_47, %c0_48] : memref<1x8x1xf32, #tpu.memory_space<vmem>>, vector<1x8x1xf32>
    %84 = vector.shape_cast %83 : vector<1x8x1xf32> to vector<8x1xf32>
    %85 = vector.shape_cast %82 : vector<8x1xf32> to vector<1x8x1xf32>
    tpu.vector_store %arg7[%c0_46, %c0_47, %c0_48], %85 {strides = array<i32>} : memref<1x8x1xf32, #tpu.memory_space<vmem>>, vector<1x8x1xf32>,
    return
  }
  func.func @transform_1(%arg0: i32, %arg1: i32) -> (i32, i32) {
    %c0_i32 = arith.constant 0 : i32
    %c0_i32_0 = arith.constant 0 : i32
    %c0_i32_1 = arith.constant 0 : i32
    return %c0_i32, %c0_i32_0 : i32, i32
  }
  func.func @transform_2(%arg0: i32, %arg1: i32) -> (i32, i32) {
    %c0_i32 = arith.constant 0 : i32
    %c0_i32_0 = arith.constant 0 : i32
    return %c0_i32, %arg1 : i32, i32
  }
  func.func @transform_3(%arg0: i32, %arg1: i32) -> (i32, i32, i32) {
    %c0_i32 = arith.constant 0 : i32
    %c0_i32_0 = arith.constant 0 : i32
    return %arg0, %c0_i32, %arg1 : i32, i32, i32
  }
  func.func @transform_4(%arg0: i32, %arg1: i32) -> (i32, i32, i32) {
    %c0_i32 = arith.constant 0 : i32
    %c0_i32_0 = arith.constant 0 : i32
    %c0_i32_1 = arith.constant 0 : i32
    return %arg0, %c0_i32, %c0_i32_0 : i32, i32, i32
  }
  func.func @transform_5(%arg0: i32, %arg1: i32) -> (i32, i32, i32) {
    %c0_i32 = arith.constant 0 : i32
    %c0_i32_0 = arith.constant 0 : i32
    %c0_i32_1 = arith.constant 0 : i32
    return %arg0, %c0_i32, %c0_i32_0 : i32, i32, i32
  }
}

</mosaic_0001>

<llo_original>
// kernel: basic_conv.3
$region0: #{basic_conv.3}
  #allocation0 [shape = 'u32[]', space=smem, size = 0x4, offset = 0x4, fixed_abs, tag = 'smem constant byte address 0x4 - core index']
  #allocation1 [shape = 'u32[72,128]{1,0:T(1,128)}', space=vmem, size = 0x9000, scoped, tag = 'internal scratch']
  %s0 = inlined_call_operand.vmem [shape: f32[2,8,384], index: 0, kind: input, shape index: {}]
  %s1 = inlined_call_operand.vmem [shape: f32[2,8,1], index: 1, kind: input, shape index: {}]
  %s2 = inlined_call_operand.vmem [shape: f32[2,8,1], index: 2, kind: input, shape index: {}]
  %s3 = inlined_call_operand.vmem [shape: f32[8,1], index: 3, kind: input, shape index: {}]
  %s4 = inlined_call_operand.vmem [shape: f32[8,1], index: 4, kind: input, shape index: {}]
  %s5 = inlined_call_operand.vmem [shape: f32[2,8,384], index: 5, kind: output, shape index: {}]
  %s6 = sld [smem:[#allocation0]]
  $region53: #{basic_conv.3} parent=0
    _
  %s8 = ssub.s32 1, %s6
  %s9 = scalar_select 0, %s8, %s6
  loop: start=0, step=1, limit=4
  $region2: #{basic_conv.3} parent=0 // loop_pre_header
    _
  $region3: #{basic_conv.3} parent=0 // loop_header
    %s11 = sphi 0, %s15
    %p12 = scmp.ge.s32.totalorder %s11, 4
    %s18 = sphi 0, %s30
    %s19 = sphi 0, %s26
    %s20 = sphi 0, %s18
    %s21 = sphi 0, %s19
    %s22 = sphi 0, %s20
    %s23 = sphi 0, %s21
    %s35 = sphi 0, %s37
    %s38 = sphi 0, %s35
    %s39 = sphi 0, %s38
    %s55 = sphi 0, %s39
    %s61 = sphi 0, %s63
    %s64 = sphi 0, %s61
    %s65 = sphi 0, %s64
    %s81 = sphi 0, %s65
    %s87 = sphi 0, %s89
    %s90 = sphi 0, %s87
    %s91 = sphi 0, %s90
    %s107 = sphi 0, %s91
    %s111 = sphi 0, %s111
    %s113 = sphi 0, %s111
    %s114 = sphi 0, %s113
    %s128 = sphi 0, %s114
    %s132 = sphi 0, %s132
    %s134 = sphi 0, %s132
    %s135 = sphi 0, %s134
    %s149 = sphi 0, %s135
    %s157 = sphi 0, %s159
    %s160 = sphi 0, %s157
    %s161 = sphi 0, %s160
    %s177 = sphi 0, %s161
  $region4: #{basic_conv.3} parent=0 // loop_header_branch
    %14 = sbr.rel (%p12) target = $region8
  $region5: #{basic_conv.3} parent=0 // loop_body
    %s16 = ssub.s32 %s11, 1
    %s17 = ssub.s32 %s11, 2
    %s24 = sadd.s32 1, %s19
    %p25 = scmp.ge.s32.totalorder %s24, 1
    %s26 = scalar_select %p25, 0, %s24
    %s27 = sadd.s32 1, %s18
    %s28 = scalar_select %p25, %s27, %s18
    %p29 = scmp.ge.s32.totalorder %s28, 2
    %s30 = scalar_select %p29, 0, %s28
    %s31 = ssub.s32 %s18, %s30
    %s32 = ssub.s32 %s19, %s26
    %s33 = sor.u32 %s31, %s32
    %p34 = scmp.eq.s32.totalorder %s33, 0
    %s36 = sadd.s32 %s35, 1
    %s37 = scalar_select %p34, %s35, %s36
    %p40 = pneg %p34
    %p41 = scmp.eq.s32.totalorder %s11, 1
    %p42 = por %p40, %p41
    %p43 = scmp.ne.s32.totalorder %s35, %s38
    %p44 = scmp.eq.s32.totalorder %s11, 0
    %p45 = por %p43, %p44
    %p46 = scmp.ne.s32.totalorder %s35, %s38
    %p47 = scmp.eq.s32.totalorder %s16, 1
    %p48 = por %p46, %p47
    %p49 = scmp.ne.s32.totalorder %s38, %s39
    %p50 = scmp.eq.s32.totalorder %s16, 0
    %p51 = por %p49, %p50
    %p52 = scmp.ne.s32.totalorder %s38, %s39
    %p53 = scmp.eq.s32.totalorder %s17, 1
    %p54 = por %p52, %p53
    %p56 = scmp.ne.s32.totalorder %s39, %s55
    %p57 = scmp.eq.s32.totalorder %s17, 0
    %p58 = por %p56, %p57
    %s59 = ssub.s32 %s18, %s30
    %p60 = scmp.eq.s32.totalorder %s59, 0
    %s62 = sadd.s32 %s61, 1
    %s63 = scalar_select %p60, %s61, %s62
    %p66 = pneg %p60
    %p67 = scmp.eq.s32.totalorder %s11, 1
    %p68 = por %p66, %p67
    %p69 = scmp.ne.s32.totalorder %s61, %s64
    %p70 = scmp.eq.s32.totalorder %s11, 0
    %p71 = por %p69, %p70
    %p72 = scmp.ne.s32.totalorder %s61, %s64
    %p73 = scmp.eq.s32.totalorder %s16, 1
    %p74 = por %p72, %p73
    %p75 = scmp.ne.s32.totalorder %s64, %s65
    %p76 = scmp.eq.s32.totalorder %s16, 0
    %p77 = por %p75, %p76
    %p78 = scmp.ne.s32.totalorder %s64, %s65
    %p79 = scmp.eq.s32.totalorder %s17, 1
    %p80 = por %p78, %p79
    %p82 = scmp.ne.s32.totalorder %s65, %s81
    %p83 = scmp.eq.s32.totalorder %s17, 0
    %p84 = por %p82, %p83
    %s85 = ssub.s32 %s18, %s30
    %p86 = scmp.eq.s32.totalorder %s85, 0
    %s88 = sadd.s32 %s87, 1
    %s89 = scalar_select %p86, %s87, %s88
    %p92 = pneg %p86
    %p93 = scmp.eq.s32.totalorder %s11, 1
    %p94 = por %p92, %p93
    %p95 = scmp.ne.s32.totalorder %s87, %s90
    %p96 = scmp.eq.s32.totalorder %s11, 0
    %p97 = por %p95, %p96
    %p98 = scmp.ne.s32.totalorder %s87, %s90
    %p99 = scmp.eq.s32.totalorder %s16, 1
    %p100 = por %p98, %p99
    %p101 = scmp.ne.s32.totalorder %s90, %s91
    %p102 = scmp.eq.s32.totalorder %s16, 0
    %p103 = por %p101, %p102
    %p104 = scmp.ne.s32.totalorder %s90, %s91
    %p105 = scmp.eq.s32.totalorder %s17, 1
    %p106 = por %p104, %p105
    %p108 = scmp.ne.s32.totalorder %s91, %s107
    %p109 = scmp.eq.s32.totalorder %s17, 0
    %p110 = por %p108, %p109
    %s112 = sadd.s32 %s111, 1
    %p115 = scmp.eq.s32.totalorder %s11, 1
    %p116 = scmp.ne.s32.totalorder %s111, %s113
    %p117 = scmp.eq.s32.totalorder %s11, 0
    %p118 = por %p116, %p117
    %p119 = scmp.ne.s32.totalorder %s111, %s113
    %p120 = scmp.eq.s32.totalorder %s16, 1
    %p121 = por %p119, %p120
    %p122 = scmp.ne.s32.totalorder %s113, %s114
    %p123 = scmp.eq.s32.totalorder %s16, 0
    %p124 = por %p122, %p123
    %p125 = scmp.ne.s32.totalorder %s113, %s114
    %p126 = scmp.eq.s32.totalorder %s17, 1
    %p127 = por %p125, %p126
    %p129 = scmp.ne.s32.totalorder %s114, %s128
    %p130 = scmp.eq.s32.totalorder %s17, 0
    %p131 = por %p129, %p130
    %s133 = sadd.s32 %s132, 1
    %p136 = scmp.eq.s32.totalorder %s11, 1
    %p137 = scmp.ne.s32.totalorder %s132, %s134
    %p138 = scmp.eq.s32.totalorder %s11, 0
    %p139 = por %p137, %p138
    %p140 = scmp.ne.s32.totalorder %s132, %s134
    %p141 = scmp.eq.s32.totalorder %s16, 1
    %p142 = por %p140, %p141
    %p143 = scmp.ne.s32.totalorder %s134, %s135
    %p144 = scmp.eq.s32.totalorder %s16, 0
    %p145 = por %p143, %p144
    %p146 = scmp.ne.s32.totalorder %s134, %s135
    %p147 = scmp.eq.s32.totalorder %s17, 1
    %p148 = por %p146, %p147
    %p150 = scmp.ne.s32.totalorder %s135, %s149
    %p151 = scmp.eq.s32.totalorder %s17, 0
    %p152 = por %p150, %p151
    %s153 = ssub.s32 %s18, %s30
    %s154 = ssub.s32 %s19, %s26
    %s155 = sor.u32 %s153, %s154
    %p156 = scmp.eq.s32.totalorder %s155, 0
    %s158 = sadd.s32 %s157, 1
    %s159 = scalar_select %p156, %s157, %s158
    %p162 = pneg %p156
    %p163 = scmp.eq.s32.totalorder %s11, 1
    %p164 = por %p162, %p163
    %p165 = scmp.ne.s32.totalorder %s157, %s160
    %p166 = scmp.eq.s32.totalorder %s11, 0
    %p167 = por %p165, %p166
    %p168 = scmp.ne.s32.totalorder %s157, %s160
    %p169 = scmp.eq.s32.totalorder %s16, 1
    %p170 = por %p168, %p169
    %p171 = scmp.ne.s32.totalorder %s160, %s161
    %p172 = scmp.eq.s32.totalorder %s16, 0
    %p173 = por %p171, %p172
    %p174 = scmp.ne.s32.totalorder %s160, %s161
    %p175 = scmp.eq.s32.totalorder %s17, 1
    %p176 = por %p174, %p175
    %p178 = scmp.ne.s32.totalorder %s161, %s177
    %p179 = scmp.eq.s32.totalorder %s17, 0
    %p180 = por %p178, %p179
    %p181 = scmp.le.s32.totalorder 1, %s11
    %p182 = scmp.lt.s32.totalorder %s11, 3
    %p183 = pnand %p181, %p182
    %p184 = pneg %p183
    // Predicated region
    $region9: #{basic_conv.3} parent=5 // pred_check
      _
    $region10: #{basic_conv.3} parent=5 // pred_check_branch
      %186 = sbr.rel (%p183) target = $region12
    $region11: #{basic_conv.3} parent=5 // pred_region
      %s187 = ssub.s32 %s11, 1
      // Predicated region
      $region13: #{basic_conv.3} parent=11 // pred_check
        %p188 = pneg %p124
      $region14: #{basic_conv.3} parent=11 // pred_check_branch
        %190 = sbr.rel (%p188) target = $region16
      $region15: #{basic_conv.3} parent=11 // pred_region
        _
      $region16: #{basic_conv.3} parent=11 // pred_fallthru
        _
      // Predicated region
      $region17: #{basic_conv.3} parent=11 // pred_check
        %p191 = pneg %p145
      $region18: #{basic_conv.3} parent=11 // pred_check_branch
        %193 = sbr.rel (%p191) target = $region20
      $region19: #{basic_conv.3} parent=11 // pred_region
        _
      $region20: #{basic_conv.3} parent=11 // pred_fallthru
        _
    $region12: #{basic_conv.3} parent=5 // pred_fallthru
      _
    %p194 = scmp.lt.s32.totalorder %s11, 2
    // Predicated region
    $region21: #{basic_conv.3} parent=5 // pred_check
      %p195 = pneg %p194
    $region22: #{basic_conv.3} parent=5 // pred_check_branch
      %197 = sbr.rel (%p195) target = $region24
    $region23: #{basic_conv.3} parent=5 // pred_region
      // Predicated region
      $region25: #{basic_conv.3} parent=23 // pred_check
        %p198 = pneg %p45
      $region26: #{basic_conv.3} parent=23 // pred_check_branch
        %200 = sbr.rel (%p198) target = $region28
      $region27: #{basic_conv.3} parent=23 // pred_region
        %s201 = smul.u32 3, %s19
        %p202 = scmp.lt.s32.totalorder %s18, 1
        %s203 = scalar_select %p202, %s18, 1
        %p204 = scmp.lt.s32.totalorder %s201, 2
        %s205 = scalar_select %p204, %s201, 2
        %s206 = smul.addr %s203, 3
        %s207 = sadd.s32 %s205, %s206
        %s208 = smul.addr %s207, 8
        %s209 = scalar_lea.vmem %s0, %s208
        %s210 = smul.u32 3, %s19
      $region28: #{basic_conv.3} parent=23 // pred_fallthru
        _
      // Predicated region
      $region29: #{basic_conv.3} parent=23 // pred_check
        %p211 = pneg %p71
      $region30: #{basic_conv.3} parent=23 // pred_check_branch
        %213 = sbr.rel (%p211) target = $region32
      $region31: #{basic_conv.3} parent=23 // pred_region
        %p214 = scmp.lt.s32.totalorder %s18, 1
        %s215 = scalar_select %p214, %s18, 1
        %s216 = smul.addr %s215, 8
        %s217 = scalar_lea.vmem %s1, %s216
      $region32: #{basic_conv.3} parent=23 // pred_fallthru
        _
      // Predicated region
      $region33: #{basic_conv.3} parent=23 // pred_check
        %p218 = pneg %p97
      $region34: #{basic_conv.3} parent=23 // pred_check_branch
        %220 = sbr.rel (%p218) target = $region36
      $region35: #{basic_conv.3} parent=23 // pred_region
        %p221 = scmp.lt.s32.totalorder %s18, 1
        %s222 = scalar_select %p221, %s18, 1
        %s223 = smul.addr %s222, 8
        %s224 = scalar_lea.vmem %s2, %s223
      $region36: #{basic_conv.3} parent=23 // pred_fallthru
        _
    $region24: #{basic_conv.3} parent=5 // pred_fallthru
      _
    %p225 = scmp.le.s32.totalorder 1, %s11
    %p226 = scmp.lt.s32.totalorder %s11, 3
    %p227 = pnand %p225, %p226
    %p228 = pneg %p227
    // Predicated region
    $region37: #{basic_conv.3} parent=5 // pred_check
      _
    $region38: #{basic_conv.3} parent=5 // pred_check_branch
      %230 = sbr.rel (%p227) target = $region40
    $region39: #{basic_conv.3} parent=5 // pred_region
      %s231 = ssub.s32 %s11, 1
      %s232 = smul.u32 3, %s21
      %p233 = scmp.lt.s32.totalorder %s20, 1
      %s234 = scalar_select %p233, %s20, 1
      %p235 = scmp.lt.s32.totalorder %s232, 2
      %s236 = scalar_select %p235, %s232, 2
      %s237 = smul.addr %s234, 3
      %s238 = sadd.s32 %s236, %s237
      %s239 = smul.addr %s238, 8
      %s240 = scalar_lea.vmem %s0, %s239
      %p241 = pneg %p51
      %p242 = pneg %p48
      %p243 = scmp.lt.s32.totalorder %s20, 1
      %s244 = scalar_select %p243, %s20, 1
      %s245 = smul.addr %s244, 8
      %s246 = scalar_lea.vmem %s1, %s245
      %p247 = pneg %p77
      %p248 = pneg %p74
      %p249 = scmp.lt.s32.totalorder %s20, 1
      %s250 = scalar_select %p249, %s20, 1
      %s251 = smul.addr %s250, 8
      %s252 = scalar_lea.vmem %s2, %s251
      %p253 = pneg %p103
      %p254 = pneg %p100
      %p255 = pneg %p124
      %p256 = pneg %p121
      %p257 = pneg %p145
      %p258 = pneg %p142
      %p259 = pneg %p173
      %p260 = pneg %p170
      %s261 = smul.u32 3, %s21
      %p262 = scmp.lt.s32.totalorder %s20, 1
      %s263 = scalar_select %p262, %s20, 1
      %p264 = scmp.lt.s32.totalorder %s261, 2
      %s265 = scalar_select %p264, %s261, 2
      %s266 = smul.addr %s263, 3
      %s267 = sadd.s32 %s265, %s266
      %s268 = smul.addr %s267, 8
      %s269 = scalar_lea.vmem %s5, %s268
      %s270 = smul.u32 3, %s21
      %p271 = scmp.lt.s32.totalorder %s20, 1
      %s272 = scalar_select %p271, %s20, 1
      %p273 = scmp.lt.s32.totalorder %s270, 2
      %s274 = scalar_select %p273, %s270, 2
      %s275 = smul.addr %s272, 3
      %s276 = sadd.s32 %s274, %s275
      %s277 = smul.addr %s276, 8
      %s278 = scalar_lea.vmem %s0, %s277
      %s279 = smul.u32 3, %s21
      %p280 = scmp.lt.s32.totalorder %s20, 1
      %s281 = scalar_select %p280, %s20, 1
      %s282 = smul.addr %s281, 8
      %s283 = scalar_lea.vmem %s1, %s282
      %p284 = scmp.lt.s32.totalorder %s20, 1
      %s285 = scalar_select %p284, %s20, 1
      %s286 = smul.addr %s285, 8
      %s287 = scalar_lea.vmem %s2, %s286
      %s288 = smul.u32 3, %s21
      %p289 = scmp.lt.s32.totalorder %s20, 1
      %s290 = scalar_select %p289, %s20, 1
      %p291 = scmp.lt.s32.totalorder %s288, 2
      %s292 = scalar_select %p291, %s288, 2
      %s293 = smul.addr %s290, 3
      %s294 = sadd.s32 %s292, %s293
      %s295 = smul.addr %s294, 8
      %s296 = scalar_lea.vmem %s5, %s295
      %s297 = smul.u32 3, %s21
      %v298 = vld [vmem:[%s283] sm:$0xff]
      %v299 = vmul.f32 %v298, 0.00390625
      %v300 = vld [vmem:[%s287] sm:$0xff]
      %v301 = vmul.f32 %v300, 0.00390625
      %v302 = vmul.f32 %v299, %v299
      %v303 = vsub.f32 %v301, %v302
      %v304 = vld [vmem:[%s3] sm:$0xff]
      %v305 = vadd.f32 %v303, 1e-05
      %v306 = vrsqrt.pop %v305
      %v307 = vmul.f32 %v306, %v305
      %v308 = vmul.f32 %v307, %v306
      %v309 = vmul.f32 0.5, %v308
      %v310 = vsub.f32 1.5, %v309
      %v311 = vmul.f32 %v306, %v310
      %vm312 = vweird.f32 %v305
      %vm313 = vweird.f32 %v306
      %vm314 = vmor %vm312, %vm313
      %v315 = vsel %vm314, %v306, %v311
      %v316 = vmul.f32 %v304, %v315
      %v317 = vld [vmem:[%s4] sm:$0xff]
      %v318 = vmul.f32 %v299, %v316
      %v319 = vsub.f32 %v317, %v318
      %v320 = vld [vmem:[%s278] sm:$0xff]
      %v321 = vld [vmem:[%s278 + $0x8] sm:$0xff]
      %v322 = vld [vmem:[%s278 + $0x10] sm:$0xff]
      %324 = vset.pattern.permute.xlu0 0
      %325 = vperm.xlu0 %324, %v316
      %v326 = vpop.permute.xlu0 %325
      %v328 = vmul.f32 %v320, %v326
      %v329 = vmul.f32 %v321, %v326
      %v330 = vmul.f32 %v322, %v326
      %332 = vset.pattern.permute.xlu0 0
      %333 = vperm.xlu0 %332, %v319
      %v334 = vpop.permute.xlu0 %333
      %v336 = vadd.f32 %v328, %v334
      %v337 = vadd.f32 %v329, %v334
      %v338 = vadd.f32 %v330, %v334
      %v339 = vmax.f32 %v336, 0.0
      %v340 = vmax.f32 %v337, 0.0
      %v341 = vmax.f32 %v338, 0.0
      %342 = vst [vmem:[%s296] sm:$0xff] %v339
      %343 = vst [vmem:[%s296 + $0x8] sm:$0xff] %v340
      %344 = vst [vmem:[%s296 + $0x10] sm:$0xff] %v341
      %s345 = smul.u32 3, %s21
      %p346 = scmp.lt.s32.totalorder %s20, 1
      %s347 = scalar_select %p346, %s20, 1
      %p348 = scmp.lt.s32.totalorder %s345, 2
      %s349 = scalar_select %p348, %s345, 2
      %s350 = smul.addr %s347, 3
      %s351 = sadd.s32 %s349, %s350
      %s352 = smul.addr %s351, 8
      %s353 = scalar_lea.vmem %s5, %s352
      // Predicated region
      $region41: #{basic_conv.3} parent=39 // pred_check
        %p354 = pneg %p170
      $region42: #{basic_conv.3} parent=39 // pred_check_branch
        %356 = sbr.rel (%p354) target = $region44
      $region43: #{basic_conv.3} parent=39 // pred_region
        %s357 = smul.u32 3, %s21
      $region44: #{basic_conv.3} parent=39 // pred_fallthru
        _
    $region40: #{basic_conv.3} parent=5 // pred_fallthru
      _
    %p358 = scmp.le.s32.totalorder 2, %s11
    // Predicated region
    $region45: #{basic_conv.3} parent=5 // pred_check
      %p359 = pneg %p358
    $region46: #{basic_conv.3} parent=5 // pred_check_branch
      %361 = sbr.rel (%p359) target = $region48
    $region47: #{basic_conv.3} parent=5 // pred_region
      %s362 = ssub.s32 %s11, 2
      // Predicated region
      $region49: #{basic_conv.3} parent=47 // pred_check
        %p363 = pneg %p176
      $region50: #{basic_conv.3} parent=47 // pred_check_branch
        %365 = sbr.rel (%p363) target = $region52
      $region51: #{basic_conv.3} parent=47 // pred_region
        %s366 = smul.u32 3, %s23
        %p367 = scmp.lt.s32.totalorder %s22, 1
        %s368 = scalar_select %p367, %s22, 1
        %p369 = scmp.lt.s32.totalorder %s366, 2
        %s370 = scalar_select %p369, %s366, 2
        %s371 = smul.addr %s368, 3
        %s372 = sadd.s32 %s370, %s371
        %s373 = smul.addr %s372, 8
        %s374 = scalar_lea.vmem %s5, %s373
      $region52: #{basic_conv.3} parent=47 // pred_fallthru
        _
    $region48: #{basic_conv.3} parent=5 // pred_fallthru
      _
  $region6: #{basic_conv.3} parent=0 // loop_footer
    %s15 = sadd.s32 1, %s11
  $region7: #{basic_conv.3} parent=0 // loop_footer_branch
    %10 = sbr.rel target = $region3
  $region8: #{basic_conv.3} parent=0 // loop_exit
    _

// kernel: basic_conv.2
$region0: #{basic_conv.2}
  #allocation0 [shape = 'u32[]', space=smem, size = 0x4, offset = 0x4, fixed_abs, tag = 'smem constant byte address 0x4 - core index']
  #allocation1 [shape = 'u32[72,128]{1,0:T(1,128)}', space=vmem, size = 0x9000, scoped, tag = 'internal scratch']
  #allocation2 [shape = 'f32[2,8,512]{2,1,0:T(8,128)}', space=vmem, size = 0x8000, scoped, tag = 'scratch operand']
  #allocation3 [shape = 'f32[72,384]{1,0:T(8,128)}', space=vmem, size = 0x1b000, scoped, tag = 'scratch operand']
  #allocation4 [shape = 's32[2]{0}', space=sflag, size = 0x8, scoped, tag = 'scratch operand']
  #allocation5 [shape = 's32[]', space=sflag, size = 0x4, offset = 0, fixed_abs, tag = 'sflag constant byte address 0x0 - dummy sync flag']
  #allocation6 [shape = 's32[]', space=sflag, size = 0x4, offset = 0, fixed_abs, tag = 'sflag constant byte address 0x0 - dummy sync flag']
  %s0 = inlined_call_operand.vmem [shape: f32[2,8,522], index: 0, kind: input, shape index: {}]
  %s1 = inlined_call_operand.vmem [shape: f32[8,72], index: 1, kind: input, shape index: {}]
  %s2 = inlined_call_operand.vmem [shape: f32[1,384], index: 2, kind: input, shape index: {}]
  %s3 = inlined_call_operand.vmem [shape: f32[2,8,384], index: 3, kind: output, shape index: {0}]
  %s4 = inlined_call_operand.vmem [shape: f32[2,8,1], index: 4, kind: output, shape index: {1}]
  %s5 = inlined_call_operand.vmem [shape: f32[2,8,1], index: 5, kind: output, shape index: {2}]
  %6 = xla_tuple %s3, %s4, %s5
  %s7 = sld [smem:[#allocation0]]
  $region103: #{basic_conv.2} parent=0
    _
  %s9 = ssub.s32 1, %s7
  %s10 = scalar_select 0, %s9, %s7
  loop: start=0, step=1, limit=4
  $region2: #{basic_conv.2} parent=0 // loop_pre_header
    _
  $region3: #{basic_conv.2} parent=0 // loop_header
    %s12 = sphi 0, %s16
    %p13 = scmp.ge.s32.totalorder %s12, 4
    %s19 = sphi 0, %s31
    %s20 = sphi 0, %s27
    %s21 = sphi 0, %s19
    %s22 = sphi 0, %s20
    %s23 = sphi 0, %s21
    %s24 = sphi 0, %s22
    %s32 = sphi 0, %s32
    %s34 = sphi 0, %s32
    %s35 = sphi 0, %s34
    %s49 = sphi 0, %s35
    %s55 = sphi 0, %s57
    %s58 = sphi 0, %s55
    %s59 = sphi 0, %s58
    %s75 = sphi 0, %s59
    %s83 = sphi 0, %s85
    %s86 = sphi 0, %s83
    %s87 = sphi 0, %s86
    %s103 = sphi 0, %s87
    %s109 = sphi 0, %s111
    %s112 = sphi 0, %s109
    %s113 = sphi 0, %s112
    %s129 = sphi 0, %s113
    %s135 = sphi 0, %s137
    %s138 = sphi 0, %s135
    %s139 = sphi 0, %s138
    %s155 = sphi 0, %s139
  $region4: #{basic_conv.2} parent=0 // loop_header_branch
    %15 = sbr.rel (%p13) target = $region8
  $region5: #{basic_conv.2} parent=0 // loop_body
    %s17 = ssub.s32 %s12, 1
    %s18 = ssub.s32 %s12, 2
    %s25 = sadd.s32 1, %s20
    %p26 = scmp.ge.s32.totalorder %s25, 1
    %s27 = scalar_select %p26, 0, %s25
    %s28 = sadd.s32 1, %s19
    %s29 = scalar_select %p26, %s28, %s19
    %p30 = scmp.ge.s32.totalorder %s29, 2
    %s31 = scalar_select %p30, 0, %s29
    %s33 = sadd.s32 %s32, 1
    %p36 = scmp.eq.s32.totalorder %s12, 1
    %p37 = scmp.ne.s32.totalorder %s32, %s34
    %p38 = scmp.eq.s32.totalorder %s12, 0
    %p39 = por %p37, %p38
    %p40 = scmp.ne.s32.totalorder %s32, %s34
    %p41 = scmp.eq.s32.totalorder %s17, 1
    %p42 = por %p40, %p41
    %p43 = scmp.ne.s32.totalorder %s34, %s35
    %p44 = scmp.eq.s32.totalorder %s17, 0
    %p45 = por %p43, %p44
    %p46 = scmp.ne.s32.totalorder %s34, %s35
    %p47 = scmp.eq.s32.totalorder %s18, 1
    %p48 = por %p46, %p47
    %p50 = scmp.ne.s32.totalorder %s35, %s49
    %p51 = scmp.eq.s32.totalorder %s18, 0
    %p52 = por %p50, %p51
    %s53 = ssub.s32 %s20, %s27
    %p54 = scmp.eq.s32.totalorder %s53, 0
    %s56 = sadd.s32 %s55, 1
    %s57 = scalar_select %p54, %s55, %s56
    %p60 = pneg %p54
    %p61 = scmp.eq.s32.totalorder %s12, 1
    %p62 = por %p60, %p61
    %p63 = scmp.ne.s32.totalorder %s55, %s58
    %p64 = scmp.eq.s32.totalorder %s12, 0
    %p65 = por %p63, %p64
    %p66 = scmp.ne.s32.totalorder %s55, %s58
    %p67 = scmp.eq.s32.totalorder %s17, 1
    %p68 = por %p66, %p67
    %p69 = scmp.ne.s32.totalorder %s58, %s59
    %p70 = scmp.eq.s32.totalorder %s17, 0
    %p71 = por %p69, %p70
    %p72 = scmp.ne.s32.totalorder %s58, %s59
    %p73 = scmp.eq.s32.totalorder %s18, 1
    %p74 = por %p72, %p73
    %p76 = scmp.ne.s32.totalorder %s59, %s75
    %p77 = scmp.eq.s32.totalorder %s18, 0
    %p78 = por %p76, %p77
    %s79 = ssub.s32 %s19, %s31
    %s80 = ssub.s32 %s20, %s27
    %s81 = sor.u32 %s79, %s80
    %p82 = scmp.eq.s32.totalorder %s81, 0
    %s84 = sadd.s32 %s83, 1
    %s85 = scalar_select %p82, %s83, %s84
    %p88 = pneg %p82
    %p89 = scmp.eq.s32.totalorder %s12, 1
    %p90 = por %p88, %p89
    %p91 = scmp.ne.s32.totalorder %s83, %s86
    %p92 = scmp.eq.s32.totalorder %s12, 0
    %p93 = por %p91, %p92
    %p94 = scmp.ne.s32.totalorder %s83, %s86
    %p95 = scmp.eq.s32.totalorder %s17, 1
    %p96 = por %p94, %p95
    %p97 = scmp.ne.s32.totalorder %s86, %s87
    %p98 = scmp.eq.s32.totalorder %s17, 0
    %p99 = por %p97, %p98
    %p100 = scmp.ne.s32.totalorder %s86, %s87
    %p101 = scmp.eq.s32.totalorder %s18, 1
    %p102 = por %p100, %p101
    %p104 = scmp.ne.s32.totalorder %s87, %s103
    %p105 = scmp.eq.s32.totalorder %s18, 0
    %p106 = por %p104, %p105
    %s107 = ssub.s32 %s19, %s31
    %p108 = scmp.eq.s32.totalorder %s107, 0
    %s110 = sadd.s32 %s109, 1
    %s111 = scalar_select %p108, %s109, %s110
    %p114 = pneg %p108
    %p115 = scmp.eq.s32.totalorder %s12, 1
    %p116 = por %p114, %p115
    %p117 = scmp.ne.s32.totalorder %s109, %s112
    %p118 = scmp.eq.s32.totalorder %s12, 0
    %p119 = por %p117, %p118
    %p120 = scmp.ne.s32.totalorder %s109, %s112
    %p121 = scmp.eq.s32.totalorder %s17, 1
    %p122 = por %p120, %p121
    %p123 = scmp.ne.s32.totalorder %s112, %s113
    %p124 = scmp.eq.s32.totalorder %s17, 0
    %p125 = por %p123, %p124
    %p126 = scmp.ne.s32.totalorder %s112, %s113
    %p127 = scmp.eq.s32.totalorder %s18, 1
    %p128 = por %p126, %p127
    %p130 = scmp.ne.s32.totalorder %s113, %s129
    %p131 = scmp.eq.s32.totalorder %s18, 0
    %p132 = por %p130, %p131
    %s133 = ssub.s32 %s19, %s31
    %p134 = scmp.eq.s32.totalorder %s133, 0
    %s136 = sadd.s32 %s135, 1
    %s137 = scalar_select %p134, %s135, %s136
    %p140 = pneg %p134
    %p141 = scmp.eq.s32.totalorder %s12, 1
    %p142 = por %p140, %p141
    %p143 = scmp.ne.s32.totalorder %s135, %s138
    %p144 = scmp.eq.s32.totalorder %s12, 0
    %p145 = por %p143, %p144
    %p146 = scmp.ne.s32.totalorder %s135, %s138
    %p147 = scmp.eq.s32.totalorder %s17, 1
    %p148 = por %p146, %p147
    %p149 = scmp.ne.s32.totalorder %s138, %s139
    %p150 = scmp.eq.s32.totalorder %s17, 0
    %p151 = por %p149, %p150
    %p152 = scmp.ne.s32.totalorder %s138, %s139
    %p153 = scmp.eq.s32.totalorder %s18, 1
    %p154 = por %p152, %p153
    %p156 = scmp.ne.s32.totalorder %s139, %s155
    %p157 = scmp.eq.s32.totalorder %s18, 0
    %p158 = por %p156, %p157
    %p159 = scmp.le.s32.totalorder 1, %s12
    %p160 = scmp.lt.s32.totalorder %s12, 3
    %p161 = pnand %p159, %p160
    %p162 = pneg %p161
    // Predicated region
    $region9: #{basic_conv.2} parent=5 // pred_check
      _
    $region10: #{basic_conv.2} parent=5 // pred_check_branch
      %164 = sbr.rel (%p161) target = $region12
    $region11: #{basic_conv.2} parent=5 // pred_region
      %s165 = ssub.s32 %s12, 1
      // Predicated region
      $region13: #{basic_conv.2} parent=11 // pred_check
        %p166 = pneg %p45
      $region14: #{basic_conv.2} parent=11 // pred_check_branch
        %168 = sbr.rel (%p166) target = $region16
      $region15: #{basic_conv.2} parent=11 // pred_region
        _
      $region16: #{basic_conv.2} parent=11 // pred_fallthru
        _
      // Predicated region
      $region17: #{basic_conv.2} parent=11 // pred_check
        %p169 = pneg %p71
      $region18: #{basic_conv.2} parent=11 // pred_check_branch
        %171 = sbr.rel (%p169) target = $region20
      $region19: #{basic_conv.2} parent=11 // pred_region
        %s172 = smul.u32 3, %s22
        %p173 = scmp.lt.s32.totalorder %s172, 2
        %s174 = scalar_select %p173, %s172, 2
        %s175 = scalar_lea.vmem %s2, %s174
        %s176 = smul.u32 3, %s22
      $region20: #{basic_conv.2} parent=11 // pred_fallthru
        _
    $region12: #{basic_conv.2} parent=5 // pred_fallthru
      _
    %p177 = scmp.lt.s32.totalorder %s12, 2
    // Predicated region
    $region21: #{basic_conv.2} parent=5 // pred_check
      %p178 = pneg %p177
    $region22: #{basic_conv.2} parent=5 // pred_check_branch
      %180 = sbr.rel (%p178) target = $region24
    $region23: #{basic_conv.2} parent=5 // pred_region
      _
    $region24: #{basic_conv.2} parent=5 // pred_fallthru
      _
    %p181 = scmp.le.s32.totalorder 1, %s12
    %p182 = scmp.lt.s32.totalorder %s12, 3
    %p183 = pnand %p181, %p182
    %p184 = pneg %p183
    // Predicated region
    $region25: #{basic_conv.2} parent=5 // pred_check
      _
    $region26: #{basic_conv.2} parent=5 // pred_check_branch
      %186 = sbr.rel (%p183) target = $region28
    $region27: #{basic_conv.2} parent=5 // pred_region
      %s187 = ssub.s32 %s12, 1
      %p188 = pneg %p45
      %p189 = pneg %p42
      %s190 = smul.u32 3, %s22
      %p191 = scmp.lt.s32.totalorder %s190, 2
      %s192 = scalar_select %p191, %s190, 2
      %s193 = scalar_lea.vmem %s2, %s192
      %p194 = pneg %p71
      %p195 = pneg %p68
      %p196 = pneg %p99
      %p197 = pneg %p96
      %s198 = smul.u32 3, %s22
      %p199 = scmp.lt.s32.totalorder %s21, 1
      %s200 = scalar_select %p199, %s21, 1
      %p201 = scmp.lt.s32.totalorder %s198, 2
      %s202 = scalar_select %p201, %s198, 2
      %s203 = smul.addr %s200, 3
      %s204 = sadd.s32 %s202, %s203
      %s205 = smul.addr %s204, 8
      %s206 = scalar_lea.vmem %s3, %s205
      %p207 = pneg %p125
      %p208 = pneg %p122
      %p209 = scmp.lt.s32.totalorder %s21, 1
      %s210 = scalar_select %p209, %s21, 1
      %s211 = smul.addr %s210, 8
      %s212 = scalar_lea.vmem %s4, %s211
      %p213 = pneg %p151
      %p214 = pneg %p148
      %p215 = scmp.lt.s32.totalorder %s21, 1
      %s216 = scalar_select %p215, %s21, 1
      %s217 = smul.addr %s216, 8
      %s218 = scalar_lea.vmem %s5, %s217
      %s219 = smul.u32 3, %s22
      %p220 = scmp.lt.s32.totalorder %s219, 2
      %s221 = scalar_select %p220, %s219, 2
      %s222 = scalar_lea.vmem %s2, %s221
      %s223 = smul.u32 3, %s22
      %s224 = smul.u32 3, %s22
      %p225 = scmp.lt.s32.totalorder %s21, 1
      %s226 = scalar_select %p225, %s21, 1
      %p227 = scmp.lt.s32.totalorder %s224, 2
      %s228 = scalar_select %p227, %s224, 2
      %s229 = smul.addr %s226, 3
      %s230 = sadd.s32 %s228, %s229
      %s231 = smul.addr %s230, 8
      %s232 = scalar_lea.vmem %s3, %s231
      %s233 = smul.u32 3, %s22
      %p234 = scmp.lt.s32.totalorder %s21, 1
      %s235 = scalar_select %p234, %s21, 1
      %s236 = smul.addr %s235, 8
      %s237 = scalar_lea.vmem %s4, %s236
      %p238 = scmp.lt.s32.totalorder %s21, 1
      %s239 = scalar_select %p238, %s21, 1
      %s240 = smul.addr %s239, 8
      %s241 = scalar_lea.vmem %s5, %s240
      %p242 = scmp.lt.s32.totalorder %s22, 0
      %s243 = ssub.s32 0, %s22
      %s244 = scalar_select %p242, %s243, %s22
      %s245 = sand.u32 %s244, 1
      %s246 = ssub.s32 0, %s245
      %s247 = scalar_select %p242, %s246, %s245
      %p248 = scmp.eq.s32.totalorder %s22, 0
      // Predicated region
      $region29: #{basic_conv.2} parent=27 // pred_check
        %p249 = pneg %p248
      $region30: #{basic_conv.2} parent=27 // pred_check_branch
        %251 = sbr.rel (%p249) target = $region32
      $region31: #{basic_conv.2} parent=27 // pred_region
        %vm252 = vcmask 7168
        %253 = vst.msk [vmem:[%s237] sm:$0xff] %vm252, 0.0
        %254 = vst.msk [vmem:[%s241] sm:$0xff] %vm252, 0.0
        %s255 = smul.u32 %s22, 384
        %s256 = sshra.s32 %s255, 7
        %s257 = sand.u32 %s255, 127
        %s258 = smul.u32 %s21, 5
        %s259 = sadd.s32 %s256, %s258
        %s260 = smul.addr %s259, 8
        %s261 = scalar_lea.vmem %s0, %s260
        %s262 = smul.u32 %s247, 4
        %s263 = smul.addr %s262, 8
        %s264 = scalar_lea.vmem [#allocation2], %s263
        %s265 = scalar_lea.sflag [#allocation4], %s247
        // Predicated region
        $region33: #{basic_conv.2} parent=31 // pred_check
          _
        $region34: #{basic_conv.2} parent=31 // pred_check_branch
          %267 = sbr.rel (0) target = $region36
        $region35: #{basic_conv.2} parent=31 // pred_region
          loop: start=0, step=1, limit=1
          $region37: #{basic_conv.2} parent=35 // loop_pre_header
            _
          $region38: #{basic_conv.2} parent=35 // loop_header
            %s269 = sphi 0, %s273
            %p270 = scmp.ge.s32.totalorder %s269, 1
            %s274 = sphi %s261, %s261
            %s275 = sphi %s264, %s264
          $region39: #{basic_conv.2} parent=35 // loop_header_branch
            %272 = sbr.rel (%p270) target = $region43
          $region40: #{basic_conv.2} parent=35 // loop_body
            %v276 = vld [vmem:[%s274] sm:$0xff]
            %277 = vst [vmem:[%s275] sm:$0xff] %v276
            %v278 = vld [vmem:[%s274 + $0x8] sm:$0xff]
            %279 = vst [vmem:[%s275 + $0x8] sm:$0xff] %v278
            %v280 = vld [vmem:[%s274 + $0x10] sm:$0xff]
            %281 = vst [vmem:[%s275 + $0x10] sm:$0xff] %v280
            %v282 = vld [vmem:[%s274 + $0x18] sm:$0xff]
            %283 = vst [vmem:[%s275 + $0x18] sm:$0xff] %v282
          $region41: #{basic_conv.2} parent=35 // loop_footer
            %s273 = sadd.s32 1, %s269
          $region42: #{basic_conv.2} parent=35 // loop_footer_branch
            %268 = sbr.rel target = $region38
          $region43: #{basic_conv.2} parent=35 // loop_exit
            _
        $region36: #{basic_conv.2} parent=31 // pred_fallthru
          _
        // Predicated region
        $region44: #{basic_conv.2} parent=31 // pred_check
          _
        $region45: #{basic_conv.2} parent=31 // pred_check_branch
          %285 = sbr.rel target = $region47
        $region46: #{basic_conv.2} parent=31 // pred_region
          _
        $region47: #{basic_conv.2} parent=31 // pred_fallthru
          _
        // Predicated region
        $region48: #{basic_conv.2} parent=31 // pred_check
          _
        $region49: #{basic_conv.2} parent=31 // pred_check_branch
          %288 = sbr.rel (0) target = $region51
        $region50: #{basic_conv.2} parent=31 // pred_region
          %289 = vsyncadd %s265, 512
        $region51: #{basic_conv.2} parent=31 // pred_fallthru
          _
      $region32: #{basic_conv.2} parent=27 // pred_fallthru
        _
      %s290 = smul.u32 %s22, 384
      %s291 = smul.u32 %s247, 4
      %s292 = smul.addr %s291, 8
      %s293 = scalar_lea.vmem [#allocation2], %s292
      %s294 = scalar_lea.sflag [#allocation4], %s247
      %s295 = smul.u32 8, 1
      %s296 = smul.u32 %s295, 4
      %s297 = sshll.u32 %s296, 4
      %298 = dma.done %s294, %s297
      %s299 = sadd.s32 %s22, 1
      %p300 = scmp.lt.s32.totalorder %s299, 1
      // Predicated region
      $region52: #{basic_conv.2} parent=27 // pred_check
        %p301 = pneg %p300
      $region53: #{basic_conv.2} parent=27 // pred_check_branch
        %303 = sbr.rel (%p301) target = $region55
      $region54: #{basic_conv.2} parent=27 // pred_region
        %s304 = ssub.s32 1, %s247
        %s305 = smul.u32 %s299, 384
        %s306 = sshra.s32 %s305, 7
        %s307 = sand.u32 %s305, 127
        %s308 = smul.u32 %s21, 5
        %s309 = sadd.s32 %s306, %s308
        %s310 = smul.addr %s309, 8
        %s311 = scalar_lea.vmem %s0, %s310
        %s312 = smul.u32 %s304, 4
        %s313 = smul.addr %s312, 8
        %s314 = scalar_lea.vmem [#allocation2], %s313
        %s315 = scalar_lea.sflag [#allocation4], %s304
        // Predicated region
        $region56: #{basic_conv.2} parent=54 // pred_check
          _
        $region57: #{basic_conv.2} parent=54 // pred_check_branch
          %317 = sbr.rel (0) target = $region59
        $region58: #{basic_conv.2} parent=54 // pred_region
          loop: start=0, step=1, limit=1
          $region60: #{basic_conv.2} parent=58 // loop_pre_header
            _
          $region61: #{basic_conv.2} parent=58 // loop_header
            %s319 = sphi 0, %s323
            %p320 = scmp.ge.s32.totalorder %s319, 1
            %s324 = sphi %s311, %s311
            %s325 = sphi %s314, %s314
          $region62: #{basic_conv.2} parent=58 // loop_header_branch
            %322 = sbr.rel (%p320) target = $region66
          $region63: #{basic_conv.2} parent=58 // loop_body
            %v326 = vld [vmem:[%s324] sm:$0xff]
            %327 = vst [vmem:[%s325] sm:$0xff] %v326
            %v328 = vld [vmem:[%s324 + $0x8] sm:$0xff]
            %329 = vst [vmem:[%s325 + $0x8] sm:$0xff] %v328
            %v330 = vld [vmem:[%s324 + $0x10] sm:$0xff]
            %331 = vst [vmem:[%s325 + $0x10] sm:$0xff] %v330
            %v332 = vld [vmem:[%s324 + $0x18] sm:$0xff]
            %333 = vst [vmem:[%s325 + $0x18] sm:$0xff] %v332
          $region64: #{basic_conv.2} parent=58 // loop_footer
            %s323 = sadd.s32 1, %s319
          $region65: #{basic_conv.2} parent=58 // loop_footer_branch
            %318 = sbr.rel target = $region61
          $region66: #{basic_conv.2} parent=58 // loop_exit
            _
        $region59: #{basic_conv.2} parent=54 // pred_fallthru
          _
        // Predicated region
        $region67: #{basic_conv.2} parent=54 // pred_check
          _
        $region68: #{basic_conv.2} parent=54 // pred_check_branch
          %335 = sbr.rel target = $region70
        $region69: #{basic_conv.2} parent=54 // pred_region
          _
        $region70: #{basic_conv.2} parent=54 // pred_fallthru
          _
        // Predicated region
        $region71: #{basic_conv.2} parent=54 // pred_check
          _
        $region72: #{basic_conv.2} parent=54 // pred_check_branch
          %338 = sbr.rel (0) target = $region74
        $region73: #{basic_conv.2} parent=54 // pred_region
          %339 = vsyncadd %s315, 512
        $region74: #{basic_conv.2} parent=54 // pred_fallthru
          _
      $region55: #{basic_conv.2} parent=27 // pred_fallthru
        _
      %v340 = vld [vmem:[%s293] sm:$0xff]
      %v341 = vld [vmem:[%s293 + $0x8] sm:$0xff]
      %v342 = vld [vmem:[%s293 + $0x10] sm:$0xff]
      %v343 = vld [vmem:[%s293 + $0x18] sm:$0xff]
      %348 = vrot.lane.b32.xlu0 %v340, 111
      %v349 = vpop.permute.xlu0 %348
      %350 = vrot.lane.b32.xlu0 %v341, 111
      %v351 = vpop.permute.xlu0 %350
      %352 = vrot.lane.b32.xlu0 %v342, 111
      %v353 = vpop.permute.xlu0 %352
      %354 = vrot.lane.b32.xlu0 %v343, 111
      %v355 = vpop.permute.xlu0 %354
      %vm356 = vcmask 908288
      %v357 = vsel %vm356, %v349, %v351
      %v358 = vsel %vm356, %v351, %v353
      %v359 = vsel %vm356, %v353, %v355
      %363 = vst [vmem:[#allocation3] sm:$0xff] %v357
      %364 = vst [vmem:[#allocation3 + $0x8] sm:$0xff] %v358
      %365 = vst [vmem:[#allocation3 + $0x10] sm:$0xff] %v359
      %v366 = vld [vmem:[%s293] sm:$0xff]
      %v367 = vld [vmem:[%s293 + $0x8] sm:$0xff]
      %v368 = vld [vmem:[%s293 + $0x10] sm:$0xff]
      %v369 = vld [vmem:[%s293 + $0x18] sm:$0xff]
      %374 = vrot.lane.b32.xlu0 %v366, 110
      %v375 = vpop.permute.xlu0 %374
      %376 = vrot.lane.b32.xlu0 %v367, 110
      %v377 = vpop.permute.xlu0 %376
      %378 = vrot.lane.b32.xlu0 %v368, 110
      %v379 = vpop.permute.xlu0 %378
      %380 = vrot.lane.b32.xlu0 %v369, 110
      %v381 = vpop.permute.xlu0 %380
      %vm382 = vcmask 900096
      %v383 = vsel %vm382, %v375, %v377
      %v384 = vsel %vm382, %v377, %v379
      %v385 = vsel %vm382, %v379, %v381
      %389 = vst [vmem:[#allocation3 + $0x18] sm:$0xff] %v383
      %390 = vst [vmem:[#allocation3 + $0x20] sm:$0xff] %v384
      %391 = vst [vmem:[#allocation3 + $0x28] sm:$0xff] %v385
      %v392 = vld [vmem:[%s293] sm:$0xff]
      %v393 = vld [vmem:[%s293 + $0x8] sm:$0xff]
      %v394 = vld [vmem:[%s293 + $0x10] sm:$0xff]
      %v395 = vld [vmem:[%s293 + $0x18] sm:$0xff]
      %400 = vrot.lane.b32.xlu0 %v392, 109
      %v401 = vpop.permute.xlu0 %400
      %402 = vrot.lane.b32.xlu0 %v393, 109
      %v403 = vpop.permute.xlu0 %402
      %404 = vrot.lane.b32.xlu0 %v394, 109
      %v405 = vpop.permute.xlu0 %404
      %406 = vrot.lane.b32.xlu0 %v395, 109
      %v407 = vpop.permute.xlu0 %406
      %vm408 = vcmask 891904
      %v409 = vsel %vm408, %v401, %v403
      %v410 = vsel %vm408, %v403, %v405
      %v411 = vsel %vm408, %v405, %v407
      %415 = vst [vmem:[#allocation3 + $0x30] sm:$0xff] %v409
      %416 = vst [vmem:[#allocation3 + $0x38] sm:$0xff] %v410
      %417 = vst [vmem:[#allocation3 + $0x40] sm:$0xff] %v411
      %v418 = vld [vmem:[%s293] sm:$0xff]
      %v419 = vld [vmem:[%s293 + $0x8] sm:$0xff]
      %v420 = vld [vmem:[%s293 + $0x10] sm:$0xff]
      %v421 = vld [vmem:[%s293 + $0x18] sm:$0xff]
      %426 = vrot.lane.b32.xlu0 %v418, 93
      %v427 = vpop.permute.xlu0 %426
      %428 = vrot.lane.b32.xlu0 %v419, 93
      %v429 = vpop.permute.xlu0 %428
      %430 = vrot.lane.b32.xlu0 %v420, 93
      %v431 = vpop.permute.xlu0 %430
      %432 = vrot.lane.b32.xlu0 %v421, 93
      %v433 = vpop.permute.xlu0 %432
      %vm434 = vcmask 760832
      %v435 = vsel %vm434, %v427, %v429
      %v436 = vsel %vm434, %v429, %v431
      %v437 = vsel %vm434, %v431, %v433
      %441 = vst [vmem:[#allocation3 + $0x48] sm:$0xff] %v435
      %442 = vst [vmem:[#allocation3 + $0x50] sm:$0xff] %v436
      %443 = vst [vmem:[#allocation3 + $0x58] sm:$0xff] %v437
      %v444 = vld [vmem:[%s293] sm:$0xff]
      %v445 = vld [vmem:[%s293 + $0x8] sm:$0xff]
      %v446 = vld [vmem:[%s293 + $0x10] sm:$0xff]
      %v447 = vld [vmem:[%s293 + $0x18] sm:$0xff]
      %452 = vrot.lane.b32.xlu0 %v444, 92
      %v453 = vpop.permute.xlu0 %452
      %454 = vrot.lane.b32.xlu0 %v445, 92
      %v455 = vpop.permute.xlu0 %454
      %456 = vrot.lane.b32.xlu0 %v446, 92
      %v457 = vpop.permute.xlu0 %456
      %458 = vrot.lane.b32.xlu0 %v447, 92
      %v459 = vpop.permute.xlu0 %458
      %vm460 = vcmask 752640
      %v461 = vsel %vm460, %v453, %v455
      %v462 = vsel %vm460, %v455, %v457
      %v463 = vsel %vm460, %v457, %v459
      %467 = vst [vmem:[#allocation3 + $0x60] sm:$0xff] %v461
      %468 = vst [vmem:[#allocation3 + $0x68] sm:$0xff] %v462
      %469 = vst [vmem:[#allocation3 + $0x70] sm:$0xff] %v463
      %v470 = vld [vmem:[%s293] sm:$0xff]
      %v471 = vld [vmem:[%s293 + $0x8] sm:$0xff]
      %v472 = vld [vmem:[%s293 + $0x10] sm:$0xff]
      %v473 = vld [vmem:[%s293 + $0x18] sm:$0xff]
      %478 = vrot.lane.b32.xlu0 %v470, 91
      %v479 = vpop.permute.xlu0 %478
      %480 = vrot.lane.b32.xlu0 %v471, 91
      %v481 = vpop.permute.xlu0 %480
      %482 = vrot.lane.b32.xlu0 %v472, 91
      %v483 = vpop.permute.xlu0 %482
      %484 = vrot.lane.b32.xlu0 %v473, 91
      %v485 = vpop.permute.xlu0 %484
      %vm486 = vcmask 744448
      %v487 = vsel %vm486, %v479, %v481
      %v488 = vsel %vm486, %v481, %v483
      %v489 = vsel %vm486, %v483, %v485
      %493 = vst [vmem:[#allocation3 + $0x78] sm:$0xff] %v487
      %494 = vst [vmem:[#allocation3 + $0x80] sm:$0xff] %v488
      %495 = vst [vmem:[#allocation3 + $0x88] sm:$0xff] %v489
      %v496 = vld [vmem:[%s293] sm:$0xff]
      %v497 = vld [vmem:[%s293 + $0x8] sm:$0xff]
      %v498 = vld [vmem:[%s293 + $0x10] sm:$0xff]
      %v499 = vld [vmem:[%s293 + $0x18] sm:$0xff]
      %504 = vrot.lane.b32.xlu0 %v496, 75
      %v505 = vpop.permute.xlu0 %504
      %506 = vrot.lane.b32.xlu0 %v497, 75
      %v507 = vpop.permute.xlu0 %506
      %508 = vrot.lane.b32.xlu0 %v498, 75
      %v509 = vpop.permute.xlu0 %508
      %510 = vrot.lane.b32.xlu0 %v499, 75
      %v511 = vpop.permute.xlu0 %510
      %vm512 = vcmask 613376
      %v513 = vsel %vm512, %v505, %v507
      %v514 = vsel %vm512, %v507, %v509
      %v515 = vsel %vm512, %v509, %v511
      %519 = vst [vmem:[#allocation3 + $0x90] sm:$0xff] %v513
      %520 = vst [vmem:[#allocation3 + $0x98] sm:$0xff] %v514
      %521 = vst [vmem:[#allocation3 + $0xa0] sm:$0xff] %v515
      %v522 = vld [vmem:[%s293] sm:$0xff]
      %v523 = vld [vmem:[%s293 + $0x8] sm:$0xff]
      %v524 = vld [vmem:[%s293 + $0x10] sm:$0xff]
      %v525 = vld [vmem:[%s293 + $0x18] sm:$0xff]
      %530 = vrot.lane.b32.xlu0 %v522, 74
      %v531 = vpop.permute.xlu0 %530
      %532 = vrot.lane.b32.xlu0 %v523, 74
      %v533 = vpop.permute.xlu0 %532
      %534 = vrot.lane.b32.xlu0 %v524, 74
      %v535 = vpop.permute.xlu0 %534
      %536 = vrot.lane.b32.xlu0 %v525, 74
      %v537 = vpop.permute.xlu0 %536
      %vm538 = vcmask 605184
      %v539 = vsel %vm538, %v531, %v533
      %v540 = vsel %vm538, %v533, %v535
      %v541 = vsel %vm538, %v535, %v537
      %545 = vst [vmem:[#allocation3 + $0xa8] sm:$0xff] %v539
      %546 = vst [vmem:[#allocation3 + $0xb0] sm:$0xff] %v540
      %547 = vst [vmem:[#allocation3 + $0xb8] sm:$0xff] %v541
      %v548 = vld [vmem:[%s293] sm:$0xff]
      %v549 = vld [vmem:[%s293 + $0x8] sm:$0xff]
      %v550 = vld [vmem:[%s293 + $0x10] sm:$0xff]
      %v551 = vld [vmem:[%s293 + $0x18] sm:$0xff]
      %556 = vrot.lane.b32.xlu0 %v548, 73
      %v557 = vpop.permute.xlu0 %556
      %558 = vrot.lane.b32.xlu0 %v549, 73
      %v559 = vpop.permute.xlu0 %558
      %560 = vrot.lane.b32.xlu0 %v550, 73
      %v561 = vpop.permute.xlu0 %560
      %562 = vrot.lane.b32.xlu0 %v551, 73
      %v563 = vpop.permute.xlu0 %562
      %vm564 = vcmask 596992
      %v565 = vsel %vm564, %v557, %v559
      %v566 = vsel %vm564, %v559, %v561
      %v567 = vsel %vm564, %v561, %v563
      %571 = vst [vmem:[#allocation3 + $0xc0] sm:$0xff] %v565
      %572 = vst [vmem:[#allocation3 + $0xc8] sm:$0xff] %v566
      %573 = vst [vmem:[#allocation3 + $0xd0] sm:$0xff] %v567
      %v574 = vld [vmem:[%s1] sm:$0xff]
      %v575 = vld [vmem:[#allocation3] sm:$0xff]
      %v576 = vld [vmem:[#allocation3 + $0x8] sm:$0xff]
      %v577 = vld [vmem:[#allocation3 + $0x10] sm:$0xff]
      %v578 = vld [vmem:[#allocation3 + $0x18] sm:$0xff]
      %v579 = vld [vmem:[#allocation3 + $0x20] sm:$0xff]
      %v580 = vld [vmem:[#allocation3 + $0x28] sm:$0xff]
      %v581 = vld [vmem:[#allocation3 + $0x30] sm:$0xff]
      %v582 = vld [vmem:[#allocation3 + $0x38] sm:$0xff]
      %v583 = vld [vmem:[#allocation3 + $0x40] sm:$0xff]
      %v584 = vld [vmem:[#allocation3 + $0x48] sm:$0xff]
      %v585 = vld [vmem:[#allocation3 + $0x50] sm:$0xff]
      %v586 = vld [vmem:[#allocation3 + $0x58] sm:$0xff]
      %v587 = vld [vmem:[#allocation3 + $0x60] sm:$0xff]
      %v588 = vld [vmem:[#allocation3 + $0x68] sm:$0xff]
      %v589 = vld [vmem:[#allocation3 + $0x70] sm:$0xff]
      %v590 = vld [vmem:[#allocation3 + $0x78] sm:$0xff]
      %v591 = vld [vmem:[#allocation3 + $0x80] sm:$0xff]
      %v592 = vld [vmem:[#allocation3 + $0x88] sm:$0xff]
      %v593 = vld [vmem:[#allocation3 + $0x90] sm:$0xff]
      %v594 = vld [vmem:[#allocation3 + $0x98] sm:$0xff]
      %v595 = vld [vmem:[#allocation3 + $0xa0] sm:$0xff]
      %v596 = vld [vmem:[#allocation3 + $0xa8] sm:$0xff]
      %v597 = vld [vmem:[#allocation3 + $0xb0] sm:$0xff]
      %v598 = vld [vmem:[#allocation3 + $0xb8] sm:$0xff]
      %v599 = vld [vmem:[#allocation3 + $0xc0] sm:$0xff]
      %v600 = vld [vmem:[#allocation3 + $0xc8] sm:$0xff]
      %v601 = vld [vmem:[#allocation3 + $0xd0] sm:$0xff]
      %vm602 = vcmask 588800
      %v604 = vsel %vm602, %v574, 0
      %606 = vmatpush.msra.mxu0 0.0
      %607 = vmatpush.msra.mxu0 0.0
      %608 = vmatpush.msra.mxu0 0.0
      %609 = vmatpush.msra.mxu0 0.0
      %610 = vmatpush.msra.mxu0 0.0
      %611 = vmatpush.msra.mxu0 0.0
      %612 = vmatpush.msra.mxu0 0.0
      %613 = vmatpush.msra.mxu0 %v599
      %614 = vmatpush.msra.mxu0 %v596
      %615 = vmatpush.msra.mxu0 %v593
      %616 = vmatpush.msra.mxu0 %v590
      %617 = vmatpush.msra.mxu0 %v587
      %618 = vmatpush.msra.mxu0 %v584
      %619 = vmatpush.msra.mxu0 %v581
      %620 = vmatpush.msra.mxu0 %v578
      %621 = vmatpush.msra.mxu0 %v575
      %622 = vmatmul.f32.gmra.mxu0 %v604
      %v623 = vpop.f32.mrf.mxu0
      %v624 = vadd.f32 0.0, %v623
      %625 = vdwg.mxu0
      %626 = vmatpush.msra.mxu0 0.0
      %627 = vmatpush.msra.mxu0 0.0
      %628 = vmatpush.msra.mxu0 0.0
      %629 = vmatpush.msra.mxu0 0.0
      %630 = vmatpush.msra.mxu0 0.0
      %631 = vmatpush.msra.mxu0 0.0
      %632 = vmatpush.msra.mxu0 0.0
      %633 = vmatpush.msra.mxu0 %v600
      %634 = vmatpush.msra.mxu0 %v597
      %635 = vmatpush.msra.mxu0 %v594
      %636 = vmatpush.msra.mxu0 %v591
      %637 = vmatpush.msra.mxu0 %v588
      %638 = vmatpush.msra.mxu0 %v585
      %639 = vmatpush.msra.mxu0 %v582
      %640 = vmatpush.msra.mxu0 %v579
      %641 = vmatpush.msra.mxu0 %v576
      %642 = vmatmul.f32.gmra.mxu0 %v604
      %v643 = vpop.f32.mrf.mxu0
      %v644 = vadd.f32 0.0, %v643
      %645 = vdwg.mxu0
      %646 = vmatpush.msra.mxu0 0.0
      %647 = vmatpush.msra.mxu0 0.0
      %648 = vmatpush.msra.mxu0 0.0
      %649 = vmatpush.msra.mxu0 0.0
      %650 = vmatpush.msra.mxu0 0.0
      %651 = vmatpush.msra.mxu0 0.0
      %652 = vmatpush.msra.mxu0 0.0
      %653 = vmatpush.msra.mxu0 %v601
      %654 = vmatpush.msra.mxu0 %v598
      %655 = vmatpush.msra.mxu0 %v595
      %656 = vmatpush.msra.mxu0 %v592
      %657 = vmatpush.msra.mxu0 %v589
      %658 = vmatpush.msra.mxu0 %v586
      %659 = vmatpush.msra.mxu0 %v583
      %660 = vmatpush.msra.mxu0 %v580
      %661 = vmatpush.msra.mxu0 %v577
      %662 = vmatmul.f32.gmra.mxu0 %v604
      %v663 = vpop.f32.mrf.mxu0
      %v664 = vadd.f32 0.0, %v663
      %665 = vdwg.mxu0
      %v666 = vmul.f32 %v624, %v624
      %v667 = vmul.f32 %v644, %v644
      %v668 = vmul.f32 %v664, %v664
      %v669 = vrot.slane %v666, 4
      %v670 = vadd.f32 %v666, %v669
      %v671 = vrot.slane %v670, 2
      %v672 = vadd.f32 %v670, %v671
      %v673 = vrot.slane %v672, 1
      %v674 = vadd.f32 %v672, %v673
      %v675 = vrot.slane %v667, 4
      %v676 = vadd.f32 %v667, %v675
      %v677 = vrot.slane %v676, 2
      %v678 = vadd.f32 %v676, %v677
      %v679 = vrot.slane %v678, 1
      %v680 = vadd.f32 %v678, %v679
      %v681 = vrot.slane %v668, 4
      %v682 = vadd.f32 %v668, %v681
      %v683 = vrot.slane %v682, 2
      %v684 = vadd.f32 %v682, %v683
      %v685 = vrot.slane %v684, 1
      %v686 = vadd.f32 %v684, %v685
      %v687 = vmax.f32 %v674, 1e-24
      %v688 = vmax.f32 %v680, 1e-24
      %v689 = vmax.f32 %v686, 1e-24
      %v690 = vrsqrt.pop %v687
      %v691 = vmul.f32 %v690, %v687
      %v692 = vmul.f32 %v691, %v690
      %v693 = vmul.f32 0.5, %v692
      %v694 = vsub.f32 1.5, %v693
      %v695 = vmul.f32 %v690, %v694
      %vm696 = vweird.f32 %v687
      %vm697 = vweird.f32 %v690
      %vm698 = vmor %vm696, %vm697
      %v699 = vsel %vm698, %v690, %v695
      %v700 = vrsqrt.pop %v688
      %v701 = vmul.f32 %v700, %v688
      %v702 = vmul.f32 %v701, %v700
      %v703 = vmul.f32 0.5, %v702
      %v704 = vsub.f32 1.5, %v703
      %v705 = vmul.f32 %v700, %v704
      %vm706 = vweird.f32 %v688
      %vm707 = vweird.f32 %v700
      %vm708 = vmor %vm706, %vm707
      %v709 = vsel %vm708, %v700, %v705
      %v710 = vrsqrt.pop %v689
      %v711 = vmul.f32 %v710, %v689
      %v712 = vmul.f32 %v711, %v710
      %v713 = vmul.f32 0.5, %v712
      %v714 = vsub.f32 1.5, %v713
      %v715 = vmul.f32 %v710, %v714
      %vm716 = vweird.f32 %v689
      %vm717 = vweird.f32 %v710
      %vm718 = vmor %vm716, %vm717
      %v719 = vsel %vm718, %v710, %v715
      %v720 = vmul.f32 %v624, %v699
      %v721 = vmul.f32 %v644, %v709
      %v722 = vmul.f32 %v664, %v719
      %723 = vst [vmem:[%s232] sm:$0xff] %v720
      %724 = vst [vmem:[%s232 + $0x8] sm:$0xff] %v721
      %725 = vst [vmem:[%s232 + $0x10] sm:$0xff] %v722
      %v726 = vld [vmem:[%s222] sm:$0x7]
      %v728 = vperm.slane %v726, 0
      %v729 = vperm.slane %v726, 1
      %v730 = vperm.slane %v726, 2
      %v734 = vmul.f32 %v720, %v728
      %v735 = vmul.f32 %v721, %v729
      %v736 = vmul.f32 %v722, %v730
      %v737 = vld [vmem:[%s237] sm:$0xff]
      %v738 = vadd.f32 %v734, %v735
      %v739 = vadd.f32 %v738, %v736
      %740 = vadd.xlane.f32.xlu0 %v739
      %v741 = vpop.xlane.xlu0 %740
      %v742 = vadd.f32 %v737, %v741
      %vm743 = vcmask 7168
      %744 = vst.msk [vmem:[%s237] sm:$0xff] %vm743, %v742
      %v745 = vld [vmem:[%s241] sm:$0xff]
      %v746 = vmul.f32 %v720, %v734
      %v747 = vmul.f32 %v721, %v735
      %v748 = vmul.f32 %v722, %v736
      %v749 = vadd.f32 %v746, %v747
      %v750 = vadd.f32 %v749, %v748
      %751 = vadd.xlane.f32.xlu0 %v750
      %v752 = vpop.xlane.xlu0 %751
      %v753 = vadd.f32 %v745, %v752
      %754 = vst.msk [vmem:[%s241] sm:$0xff] %vm743, %v753
      %s755 = smul.u32 3, %s22
      %p756 = scmp.lt.s32.totalorder %s21, 1
      %s757 = scalar_select %p756, %s21, 1
      %p758 = scmp.lt.s32.totalorder %s755, 2
      %s759 = scalar_select %p758, %s755, 2
      %s760 = smul.addr %s757, 3
      %s761 = sadd.s32 %s759, %s760
      %s762 = smul.addr %s761, 8
      %s763 = scalar_lea.vmem %s3, %s762
      %p764 = scmp.lt.s32.totalorder %s21, 1
      %s765 = scalar_select %p764, %s21, 1
      %s766 = smul.addr %s765, 8
      %s767 = scalar_lea.vmem %s4, %s766
      %p768 = scmp.lt.s32.totalorder %s21, 1
      %s769 = scalar_select %p768, %s21, 1
      %s770 = smul.addr %s769, 8
      %s771 = scalar_lea.vmem %s5, %s770
      // Predicated region
      $region75: #{basic_conv.2} parent=27 // pred_check
        %p772 = pneg %p96
      $region76: #{basic_conv.2} parent=27 // pred_check_branch
        %774 = sbr.rel (%p772) target = $region78
      $region77: #{basic_conv.2} parent=27 // pred_region
        %s775 = smul.u32 3, %s22
      $region78: #{basic_conv.2} parent=27 // pred_fallthru
        _
      // Predicated region
      $region79: #{basic_conv.2} parent=27 // pred_check
        %p776 = pneg %p122
      $region80: #{basic_conv.2} parent=27 // pred_check_branch
        %778 = sbr.rel (%p776) target = $region82
      $region81: #{basic_conv.2} parent=27 // pred_region
        _
      $region82: #{basic_conv.2} parent=27 // pred_fallthru
        _
      // Predicated region
      $region83: #{basic_conv.2} parent=27 // pred_check
        %p779 = pneg %p148
      $region84: #{basic_conv.2} parent=27 // pred_check_branch
        %781 = sbr.rel (%p779) target = $region86
      $region85: #{basic_conv.2} parent=27 // pred_region
        _
      $region86: #{basic_conv.2} parent=27 // pred_fallthru
        _
    $region28: #{basic_conv.2} parent=5 // pred_fallthru
      _
    %p782 = scmp.le.s32.totalorder 2, %s12
    // Predicated region
    $region87: #{basic_conv.2} parent=5 // pred_check
      %p783 = pneg %p782
    $region88: #{basic_conv.2} parent=5 // pred_check_branch
      %785 = sbr.rel (%p783) target = $region90
    $region89: #{basic_conv.2} parent=5 // pred_region
      %s786 = ssub.s32 %s12, 2
      // Predicated region
      $region91: #{basic_conv.2} parent=89 // pred_check
        %p787 = pneg %p102
      $region92: #{basic_conv.2} parent=89 // pred_check_branch
        %789 = sbr.rel (%p787) target = $region94
      $region93: #{basic_conv.2} parent=89 // pred_region
        %s790 = smul.u32 3, %s24
        %p791 = scmp.lt.s32.totalorder %s23, 1
        %s792 = scalar_select %p791, %s23, 1
        %p793 = scmp.lt.s32.totalorder %s790, 2
        %s794 = scalar_select %p793, %s790, 2
        %s795 = smul.addr %s792, 3
        %s796 = sadd.s32 %s794, %s795
        %s797 = smul.addr %s796, 8
        %s798 = scalar_lea.vmem %s3, %s797
      $region94: #{basic_conv.2} parent=89 // pred_fallthru
        _
      // Predicated region
      $region95: #{basic_conv.2} parent=89 // pred_check
        %p799 = pneg %p128
      $region96: #{basic_conv.2} parent=89 // pred_check_branch
        %801 = sbr.rel (%p799) target = $region98
      $region97: #{basic_conv.2} parent=89 // pred_region
        %p802 = scmp.lt.s32.totalorder %s23, 1
        %s803 = scalar_select %p802, %s23, 1
        %s804 = smul.addr %s803, 8
        %s805 = scalar_lea.vmem %s4, %s804
      $region98: #{basic_conv.2} parent=89 // pred_fallthru
        _
      // Predicated region
      $region99: #{basic_conv.2} parent=89 // pred_check
        %p806 = pneg %p154
      $region100: #{basic_conv.2} parent=89 // pred_check_branch
        %808 = sbr.rel (%p806) target = $region102
      $region101: #{basic_conv.2} parent=89 // pred_region
        %p809 = scmp.lt.s32.totalorder %s23, 1
        %s810 = scalar_select %p809, %s23, 1
        %s811 = smul.addr %s810, 8
        %s812 = scalar_lea.vmem %s5, %s811
      $region102: #{basic_conv.2} parent=89 // pred_fallthru
        _
    $region90: #{basic_conv.2} parent=5 // pred_fallthru
      _
  $region6: #{basic_conv.2} parent=0 // loop_footer
    %s16 = sadd.s32 1, %s12
  $region7: #{basic_conv.2} parent=0 // loop_footer_branch
    %11 = sbr.rel target = $region3
  $region8: #{basic_conv.2} parent=0 // loop_exit
    _
  %813 = vsyncmov [#allocation4]
  %s814 = vpop.sfrf %813
  %p815 = scmp.eq.s32.totalorder %s814, 0
  %p816 = pneg %p815
  %818 = shalt.err (%p816)
  %s819 = scalar_lea.sflag [#allocation4], 1
  %820 = vsyncmov %s819
  %s821 = vpop.sfrf %820
  %p822 = scmp.eq.s32.totalorder %s821, 0
  %p823 = pneg %p822
  %825 = shalt.err (%p823)

</llo_original>
